<compile_context>
chip_gen: v5e
topology: v5e:2x2
jax: 0.10.0
libtpu: 0.0.40
codegen_flags: <defaults>
</compile_context>

<pallas_src>
import numpy as np
import jax
import jax.numpy as jnp
from jax.experimental import pallas as pl
from jax.experimental.pallas import tpu as pltpu

C = 14            # input_dim (3 * C == 42 matches the nn.Linear(42, 64) adapter)
L = 30            # sequence length implied by the MaxPool kernel sizes
L1 = 15           # conv1 (k=3, s=2, p=1, d=1) output length
C3 = 3 * C        # 42: fused channel width of the three encoders
LPOS = 6          # conv2 output positions, padded to the max over encoders
HID = 32          # regressor hidden_dim
OUT_W = 128       # lane-dense packed output: [feat 42 | hint 64 | pred 1 | zero pad 21]
NEG_SLOPE = 0.01  # LeakyReLU default slope
NEG_BIG = -1e30   # bias for padded conv2 positions so they never win the max-pool

FEAT_OFF = 0
HINT_OFF = C3            # 42
PRED_OFF = C3 + 64       # 106

# per-encoder conv2 config: (kernel, dilation, out_len); MaxPool covers the full out_len
ENC_CFG = [(3, 4, 5), (5, 2, 5), (7, 1, 6)]


def _round_up(n, m):
    return ((n + m - 1) // m) * m


def _ceil_div(a, b):
    return -(-a // b)


def _leaky(x):
    return jnp.where(x >= 0, x, NEG_SLOPE * x)


def student_kernel(x_ref, w1_ref, b1_ref, w2_ref, b2_ref,
                   wf_ref, bf_ref, wr2_ref, br2_ref, out_ref):
    """One batch block of TB samples; all conv structure is baked into the weights."""
    x = x_ref[...]                                                    # (TB, L*C)

    # conv1: all encoders / taps / positions in a single MXU matmul, then LeakyReLU.
    y1 = jnp.dot(x, w1_ref[...], preferred_element_type=jnp.float32) + b1_ref[...]
    y1 = _leaky(y1)                                                   # (TB, L1*42)

    # conv2: ONE fused matmul over all encoders and all 6 output positions (N = 252).
    # Padded positions carry a -1e30 bias. MaxPool(full length) = running max over the
    # six 42-wide lane slices; LeakyReLU is monotone so it is applied once after the max.
    y2 = jnp.dot(y1, w2_ref[...], preferred_element_type=jnp.float32) + b2_ref[...]
    m = y2[:, 0:C3]
    for t in range(1, LPOS):
        m = jnp.maximum(m, y2[:, t * C3:(t + 1) * C3])
    fe = _leaky(m)                                                    # (TB, 42), PyTorch order

    # adapter Linear(42,64) fused with regressor Linear(64,32) into one N=96 matmul:
    # cols [0:64] are the hint, cols [64:96] are the (pre-ReLU) regressor hidden.
    hh = jnp.dot(fe, wf_ref[...], preferred_element_type=jnp.float32) + bf_ref[...]
    hint = hh[:, 0:64]
    h = jnp.maximum(hh[:, 64:64 + HID], 0.0)
    # TODO(synk): Dropout is identity (eval semantics); torch training RNG not reproduced.

    # final Linear(32, 1) on the VPU/XLU: multiply + 32-wide lane reduction (no N=1 matmul).
    pred = jnp.sum(h * wr2_ref[...], axis=-1, keepdims=True) + br2_ref[...]   # (TB, 1)

    # assemble the lane-dense (TB, 128) slab in registers, single unmasked full store
    pad = jnp.zeros((fe.shape[0], OUT_W - C3 - 64 - 1), jnp.float32)
    out_ref[...] = jnp.concatenate([fe, hint, pred, pad], axis=-1)


def _const_spec(arr):
    return pl.BlockSpec(arr.shape, lambda i, _z=(0,) * arr.ndim: _z)


def _build_constants(params):
    """Fold conv stride/dilation/zero-pad gathers and the PyTorch interleave permutation
    into dense matmul weights, and fuse adapter + first regressor Linear."""
    # ---- conv1: W1big[(l*C + c_in), (t*42 + e*14 + c_out)] ----
    p1 = np.zeros((L, L1, 3), np.float32)
    for t in range(L1):
        for k in range(3):
            l = 2 * t - 1 + k
            if 0 <= l < L:
                p1[l, t, k] = 1.0
    w1_stack = jnp.stack([params[f"w1_{e}"] for e in range(3)])       # (3, C_out, C_in, 3)
    w1big = jnp.einsum("ltk,eock->lcteo", jnp.asarray(p1), w1_stack)
    w1big = w1big.reshape(L * C, L1 * C3)                             # (420, 630)
    b1row = jnp.concatenate([params[f"b1_{e}"] for e in range(3)])    # (42,)
    b1big = jnp.tile(b1row, L1).reshape(1, L1 * C3)                   # (1, 630)

    # ---- conv2 (fused over positions, PyTorch column order c*3+e folded in) ----
    big4 = jnp.zeros((LPOS, L1, C3, C3), jnp.float32)   # [t, t', e*14+c_in, c_out*3+e]
    b2perm = jnp.full((LPOS, C3), NEG_BIG, jnp.float32)
    for e, (k2, d2, l2) in enumerate(ENC_CFG):
        p2 = np.zeros((L1, LPOS, k2), np.float32)
        for t in range(l2):
            for k in range(k2):
                tp = 2 * t - 1 + d2 * k
                if 0 <= tp < L1:
                    p2[tp, t, k] = 1.0
        v = jnp.einsum("ptk,ock->tpco", jnp.asarray(p2), params[f"w2_{e}"])  # (6,15,C,C)
        big4 = big4.at[:, :, e * C:(e + 1) * C, e::3].set(v)
        b2perm = b2perm.at[:l2, e::3].set(
            jnp.broadcast_to(params[f"b2_{e}"], (l2, C)))
    w2big = jnp.transpose(big4, (1, 2, 0, 3)).reshape(L1 * C3, LPOS * C3)    # (630, 252)
    b2big = b2perm.reshape(1, LPOS * C3)                                     # (1, 252)

    # ---- adapter fused with regressor Linear(64, 32): (42, 96) ----
    wa_t = params["wa"].T                                              # (42, 64), rows c*3+e
    ba = params["ba"]                                                  # (64,)
    wr1 = params["wr1"]                                                # (32, 64)
    wf = jnp.concatenate([wa_t, wa_t @ wr1.T], axis=1)                 # (42, 96)
    bf = jnp.concatenate([ba, ba @ wr1.T + params["br1"]]).reshape(1, 64 + HID)

    # ---- final Linear(32, 1) kept as a VPU row vector ----
    wr2row = params["wr2"].reshape(1, HID)                             # (1, 32)
    br2 = params["br2"].reshape(1, 1)

    return [w1big, b1big, w2big, b2big, wf, bf, wr2row, br2]


def _pick_tb(B, block_batch):
    """Batch tile: multiple of 8, aim for >=2 (and even) grid blocks, cap at block_batch."""
    if B <= 8:
        return 8
    tb = min(block_batch, _round_up(_ceil_div(B, 2), 8))
    n = _ceil_div(B, tb)
    if n > 2 and n % 2 == 1:
        tb = min(block_batch, _round_up(_ceil_div(B, n + 1), 8))
    return tb


def cnn_rul_student_forward(x_ncl, params, *, block_batch=512):
    """x_ncl: (B, C, L) float32, same layout as the PyTorch module input.
    Returns (predictions (B,), features (B, 42), hint (B, 64))."""
    B = int(x_ncl.shape[0])
    block_batch = max(8, _round_up(int(block_batch), 8))

    # (B, C, L) -> (B, L, C) -> (B, L*C), flat index = l*C + c
    x2d = jnp.transpose(x_ncl, (0, 2, 1)).reshape(B, L * C).astype(jnp.float32)

    TB = _pick_tb(B, block_batch)
    B_pad = _round_up(B, TB)
    if B_pad != B:
        x2d = jnp.pad(x2d, ((0, B_pad - B), (0, 0)))
    n_blocks = B_pad // TB

    consts = _build_constants(params)
    in_specs = [pl.BlockSpec((TB, L * C), lambda i: (i, 0))]
    in_specs += [_const_spec(a) for a in consts]
    out_spec = pl.BlockSpec((TB, OUT_W), lambda i: (i, 0))

    flops = 2 * B_pad * (L * C * L1 * C3 + L1 * C3 * LPOS * C3 + C3 * (64 + HID) + HID)
    const_bytes = 4 * sum(int(np.prod(a.shape)) for a in consts)
    bytes_accessed = 4 * B_pad * (L * C + OUT_W) + const_bytes

    out = pl.pallas_call(
        student_kernel,
        out_shape=jax.ShapeDtypeStruct((B_pad, OUT_W), jnp.float32),
        grid=(n_blocks,),
        in_specs=in_specs,
        out_specs=out_spec,
        compiler_params=pltpu.CompilerParams(dimension_semantics=("parallel",)),
        cost_estimate=pl.CostEstimate(flops=int(flops), transcendentals=0,
                                      bytes_accessed=int(bytes_accessed)),
    )(x2d, *consts)

    features = out[:B, FEAT_OFF:FEAT_OFF + C3]     # already in PyTorch order c*3 + e
    hint = out[:B, HINT_OFF:HINT_OFF + 64]
    pred = out[:B, PRED_OFF]
    return pred, features, hint


def init_params(key):
    keys = jax.random.split(key, 20)
    it = iter(keys)

    def rnd(shape, scale=0.1):
        return scale * jax.random.normal(next(it), shape, dtype=jnp.float32)

    params = {}
    for e, (k2, _, _) in enumerate(ENC_CFG):
        params[f"w1_{e}"] = rnd((C, C, 3))       # PyTorch Conv1d weight (C_out, C_in, K)
        params[f"b1_{e}"] = rnd((C,))
        params[f"w2_{e}"] = rnd((C, C, k2))
        params[f"b2_{e}"] = rnd((C,))
    params["wa"] = rnd((64, 3 * C))              # adapter Linear(42, 64)
    params["ba"] = rnd((64,))
    params["wr1"] = rnd((HID, 64))               # regressor Linear(64, HID)
    params["br1"] = rnd((HID,))
    params["wr2"] = rnd((1, HID))                # regressor Linear(HID, 1)
    params["br2"] = rnd((1,))
    return params


def reference_forward(x_ncl, params):
    """Pure-JAX reference mirroring the PyTorch module (eval mode)."""
    def conv1d(x, w, b, stride, pad, dil):
        out = jax.lax.conv_general_dilated(
            x, w, window_strides=(stride,), padding=[(pad, pad)],
            rhs_dilation=(dil,), dimension_numbers=("NCH", "OIH", "NCH"))
        return out + b[None, :, None]

    feas = []
    for e, (_, d2, _) in enumerate(ENC_CFG):
        y = _leaky(conv1d(x_ncl, params[f"w1_{e}"], params[f"b1_{e}"], 2, 1, 1))
        y = _leaky(conv1d(y, params[f"w2_{e}"], params[f"b2_{e}"], 2, 1, d2))
        feas.append(jnp.max(y, axis=2, keepdims=True))        # MaxPool over full length
    features = jnp.concatenate(feas, axis=2).reshape(x_ncl.shape[0], -1)
    hint = features @ params["wa"].T + params["ba"]
    h = jnp.maximum(hint @ params["wr1"].T + params["br1"], 0.0)
    pred = h @ params["wr2"].T + params["br2"]
    return pred.squeeze(), features, hint


if __name__ == "__main__":
    key = jax.random.PRNGKey(0)
    pkey, xkey = jax.random.split(key)
    params = init_params(pkey)

    B = 20
    x = jax.random.normal(xkey, (B, C, L), dtype=jnp.float32)    # PyTorch NCL input

    # default block_batch: B=20 -> TB=16, 2 grid blocks, exercises batch padding
    pred, features, hint = cnn_rul_student_forward(x, params)
    jax.block_until_ready((pred, features, hint))

    rp, rf, rh = reference_forward(x, params)
    assert pred.shape == (B,) and features.shape == (B, 3 * C) and hint.shape == (B, 64)
    np.testing.assert_allclose(np.asarray(pred), np.asarray(rp), rtol=1e-4, atol=1e-4)
    np.testing.assert_allclose(np.asarray(features), np.asarray(rf), rtol=1e-4, atol=1e-4)
    np.testing.assert_allclose(np.asarray(hint), np.asarray(rh), rtol=1e-4, atol=1e-4)

    # single-block / tiny-batch path (B < 8) to cover the padding edge case
    xb = jax.random.normal(jax.random.PRNGKey(3), (4, C, L), dtype=jnp.float32)
    pb, fb, hb = cnn_rul_student_forward(xb, params)
    jax.block_until_ready((pb, fb, hb))
    rpb, rfb, rhb = reference_forward(xb, params)
    np.testing.assert_allclose(np.asarray(pb), np.asarray(rpb), rtol=1e-4, atol=1e-4)
    np.testing.assert_allclose(np.asarray(fb), np.asarray(rfb), rtol=1e-4, atol=1e-4)
    np.testing.assert_allclose(np.asarray(hb), np.asarray(rhb), rtol=1e-4, atol=1e-4)

    print("KERNEL_OK")
</pallas_src>

<mosaic_0001>
module attributes {stable_mosaic.version = 11 : i64} {
  func.func @student_kernel(%arg0: i32, %arg1: memref<16x420xf32, #tpu.memory_space<vmem>>, %arg2: memref<420x630xf32, #tpu.memory_space<vmem>>, %arg3: memref<1x630xf32, #tpu.memory_space<vmem>>, %arg4: memref<630x252xf32, #tpu.memory_space<vmem>>, %arg5: memref<1x252xf32, #tpu.memory_space<vmem>>, %arg6: memref<42x96xf32, #tpu.memory_space<vmem>>, %arg7: memref<1x96xf32, #tpu.memory_space<vmem>>, %arg8: memref<1x32xf32, #tpu.memory_space<vmem>>, %arg9: memref<1x1xf32, #tpu.memory_space<vmem>>, %arg10: memref<16x128xf32, #tpu.memory_space<vmem>>) attributes {dimension_semantics = [#tpu.dimension_semantics<parallel>], iteration_bounds = array<i64: 2>, scalar_prefetch = 0 : i64, scratch_operands = 0 : i64, tpu.core_type = #tpu.core_type<tc>, window_params = [{transform_indices = @transform_0, window_bounds = array<i64: 16, 420>}, {pipeline_mode = #tpu.pipeline_mode<synchronous>, transform_indices = @transform_1, window_bounds = array<i64: 420, 630>}, {pipeline_mode = #tpu.pipeline_mode<synchronous>, transform_indices = @transform_2, window_bounds = array<i64: 1, 630>}, {pipeline_mode = #tpu.pipeline_mode<synchronous>, transform_indices = @transform_3, window_bounds = array<i64: 630, 252>}, {pipeline_mode = #tpu.pipeline_mode<synchronous>, transform_indices = @transform_4, window_bounds = array<i64: 1, 252>}, {pipeline_mode = #tpu.pipeline_mode<synchronous>, transform_indices = @transform_5, window_bounds = array<i64: 42, 96>}, {pipeline_mode = #tpu.pipeline_mode<synchronous>, transform_indices = @transform_6, window_bounds = array<i64: 1, 96>}, {pipeline_mode = #tpu.pipeline_mode<synchronous>, transform_indices = @transform_7, window_bounds = array<i64: 1, 32>}, {pipeline_mode = #tpu.pipeline_mode<synchronous>, transform_indices = @transform_8, window_bounds = array<i64: 1, 1>}, {transform_indices = @transform_9, window_bounds = array<i64: 16, 128>}]} {
    %c0 = arith.constant 0 : index
    %c0_0 = arith.constant 0 : index
    %0 = vector.load %arg1[%c0, %c0_0] : memref<16x420xf32, #tpu.memory_space<vmem>>, vector<16x420xf32>
    %c0_1 = arith.constant 0 : index
    %c0_2 = arith.constant 0 : index
    %1 = vector.load %arg2[%c0_1, %c0_2] : memref<420x630xf32, #tpu.memory_space<vmem>>, vector<420x630xf32>
    %cst = arith.constant dense<0.000000e+00> : vector<16x630xf32>
    %2 = tpu.matmul %0, %1, %cst {dimension_numbers = #tpu.dot_dimension_numbers<[1], [0], [0], [1], [0, 0, 1, 1], [], []>} : vector<16x420xf32>, vector<420x630xf32>, vector<16x630xf32> -> vector<16x630xf32>
    %c0_3 = arith.constant 0 : index
    %c0_4 = arith.constant 0 : index
    %3 = vector.load %arg3[%c0_3, %c0_4] : memref<1x630xf32, #tpu.memory_space<vmem>>, vector<1x630xf32>
    %4 = vector.broadcast %3 : vector<1x630xf32> to vector<16x630xf32>
    %5 = arith.addf %2, %4 : vector<16x630xf32>
    %cst_5 = arith.constant 0.000000e+00 : f32
    %6 = vector.broadcast %cst_5 : f32 to vector<16x630xf32>
    %7 = arith.cmpf oge, %5, %6 : vector<16x630xf32>
    %cst_6 = arith.constant 0.00999999977 : f32
    %8 = vector.broadcast %cst_6 : f32 to vector<16x630xf32>
    %9 = arith.mulf %8, %5 : vector<16x630xf32>
    %10 = arith.select %7, %5, %9 : vector<16x630xi1>, vector<16x630xf32>
    %c0_7 = arith.constant 0 : index
    %c0_8 = arith.constant 0 : index
    %11 = vector.load %arg4[%c0_7, %c0_8] : memref<630x252xf32, #tpu.memory_space<vmem>>, vector<630x252xf32>
    %cst_9 = arith.constant dense<0.000000e+00> : vector<16x252xf32>
    %12 = tpu.matmul %10, %11, %cst_9 {dimension_numbers = #tpu.dot_dimension_numbers<[1], [0], [0], [1], [0, 0, 1, 1], [], []>} : vector<16x630xf32>, vector<630x252xf32>, vector<16x252xf32> -> vector<16x252xf32>
    %c0_10 = arith.constant 0 : index
    %c0_11 = arith.constant 0 : index
    %13 = vector.load %arg5[%c0_10, %c0_11] : memref<1x252xf32, #tpu.memory_space<vmem>>, vector<1x252xf32>
    %14 = vector.broadcast %13 : vector<1x252xf32> to vector<16x252xf32>
    %15 = arith.addf %12, %14 : vector<16x252xf32>
    %16 = vector.extract_strided_slice %15 {offsets = [0, 0], sizes = [16, 42], strides = [1, 1]} : vector<16x252xf32> to vector<16x42xf32>
    %17 = vector.extract_strided_slice %15 {offsets = [0, 42], sizes = [16, 42], strides = [1, 1]} : vector<16x252xf32> to vector<16x42xf32>
    %18 = arith.maximumf %16, %17 : vector<16x42xf32>
    %19 = vector.extract_strided_slice %15 {offsets = [0, 84], sizes = [16, 42], strides = [1, 1]} : vector<16x252xf32> to vector<16x42xf32>
    %20 = arith.maximumf %18, %19 : vector<16x42xf32>
    %21 = vector.extract_strided_slice %15 {offsets = [0, 126], sizes = [16, 42], strides = [1, 1]} : vector<16x252xf32> to vector<16x42xf32>
    %22 = arith.maximumf %20, %21 : vector<16x42xf32>
    %23 = vector.extract_strided_slice %15 {offsets = [0, 168], sizes = [16, 42], strides = [1, 1]} : vector<16x252xf32> to vector<16x42xf32>
    %24 = arith.maximumf %22, %23 : vector<16x42xf32>
    %25 = vector.extract_strided_slice %15 {offsets = [0, 210], sizes = [16, 42], strides = [1, 1]} : vector<16x252xf32> to vector<16x42xf32>
    %26 = arith.maximumf %24, %25 : vector<16x42xf32>
    %cst_12 = arith.constant 0.000000e+00 : f32
    %27 = vector.broadcast %cst_12 : f32 to vector<16x42xf32>
    %28 = arith.cmpf oge, %26, %27 : vector<16x42xf32>
    %cst_13 = arith.constant 0.00999999977 : f32
    %29 = vector.broadcast %cst_13 : f32 to vector<16x42xf32>
    %30 = arith.mulf %29, %26 : vector<16x42xf32>
    %31 = arith.select %28, %26, %30 : vector<16x42xi1>, vector<16x42xf32>
    %c0_14 = arith.constant 0 : index
    %c0_15 = arith.constant 0 : index
    %32 = vector.load %arg6[%c0_14, %c0_15] : memref<42x96xf32, #tpu.memory_space<vmem>>, vector<42x96xf32>
    %cst_16 = arith.constant dense<0.000000e+00> : vector<16x96xf32>
    %33 = tpu.matmul %31, %32, %cst_16 {dimension_numbers = #tpu.dot_dimension_numbers<[1], [0], [0], [1], [0, 0, 1, 1], [], []>} : vector<16x42xf32>, vector<42x96xf32>, vector<16x96xf32> -> vector<16x96xf32>
    %c0_17 = arith.constant 0 : index
    %c0_18 = arith.constant 0 : index
    %34 = vector.load %arg7[%c0_17, %c0_18] : memref<1x96xf32, #tpu.memory_space<vmem>>, vector<1x96xf32>
    %35 = vector.broadcast %34 : vector<1x96xf32> to vector<16x96xf32>
    %36 = arith.addf %33, %35 : vector<16x96xf32>
    %37 = vector.extract_strided_slice %36 {offsets = [0, 0], sizes = [16, 64], strides = [1, 1]} : vector<16x96xf32> to vector<16x64xf32>
    %38 = vector.extract_strided_slice %36 {offsets = [0, 64], sizes = [16, 32], strides = [1, 1]} : vector<16x96xf32> to vector<16x32xf32>
    %cst_19 = arith.constant 0.000000e+00 : f32
    %39 = vector.broadcast %cst_19 : f32 to vector<16x32xf32>
    %40 = arith.maximumf %38, %39 : vector<16x32xf32>
    %c0_20 = arith.constant 0 : index
    %c0_21 = arith.constant 0 : index
    %41 = vector.load %arg8[%c0_20, %c0_21] : memref<1x32xf32, #tpu.memory_space<vmem>>, vector<1x32xf32>
    %42 = vector.broadcast %41 : vector<1x32xf32> to vector<16x32xf32>
    %43 = arith.mulf %40, %42 : vector<16x32xf32>
    %cst_22 = arith.constant dense<0.000000e+00> : vector<16xf32>
    %44 = vector.multi_reduction <add>, %43, %cst_22 [1] : vector<16x32xf32> to vector<16xf32>
    %45 = vector.shape_cast %44 : vector<16xf32> to vector<16x1xf32>
    %c0_23 = arith.constant 0 : index
    %c0_24 = arith.constant 0 : index
    %46 = vector.load %arg9[%c0_23, %c0_24] : memref<1x1xf32, #tpu.memory_space<vmem>>, vector<1x1xf32>
    %47 = vector.broadcast %46 : vector<1x1xf32> to vector<16x1xf32>
    %48 = arith.addf %45, %47 : vector<16x1xf32>
    %cst_25 = arith.constant 0.000000e+00 : f32
    %49 = vector.broadcast %cst_25 : f32 to vector<16x21xf32>
    %50 = tpu.concatenate %31, %37, %48, %49 in 1 : vector<16x42xf32>, vector<16x64xf32>, vector<16x1xf32>, vector<16x21xf32> -> vector<16x128xf32>
    %c0_26 = arith.constant 0 : index
    %c0_27 = arith.constant 0 : index
    %51 = vector.load %arg10[%c0_26, %c0_27] : memref<16x128xf32, #tpu.memory_space<vmem>>, vector<16x128xf32>
    tpu.vector_store %arg10[%c0_26, %c0_27], %50 {strides = array<i32>} : memref<16x128xf32, #tpu.memory_space<vmem>>, vector<16x128xf32>,
    return
  }
  func.func @transform_0(%arg0: i32) -> (i32, i32) {
    %c0_i32 = arith.constant 0 : i32
    %c0_i32_0 = arith.constant 0 : i32
    return %arg0, %c0_i32 : i32, i32
  }
  func.func @transform_1(%arg0: i32) -> (i32, i32) {
    %c0_i32 = arith.constant 0 : i32
    %c0_i32_0 = arith.constant 0 : i32
    %c0_i32_1 = arith.constant 0 : i32
    return %c0_i32, %c0_i32_0 : i32, i32
  }
  func.func @transform_2(%arg0: i32) -> (i32, i32) {
    %c0_i32 = arith.constant 0 : i32
    %c0_i32_0 = arith.constant 0 : i32
    %c0_i32_1 = arith.constant 0 : i32
    return %c0_i32, %c0_i32_0 : i32, i32
  }
  func.func @transform_3(%arg0: i32) -> (i32, i32) {
    %c0_i32 = arith.constant 0 : i32
    %c0_i32_0 = arith.constant 0 : i32
    %c0_i32_1 = arith.constant 0 : i32
    return %c0_i32, %c0_i32_0 : i32, i32
  }
  func.func @transform_4(%arg0: i32) -> (i32, i32) {
    %c0_i32 = arith.constant 0 : i32
    %c0_i32_0 = arith.constant 0 : i32
    %c0_i32_1 = arith.constant 0 : i32
    return %c0_i32, %c0_i32_0 : i32, i32
  }
  func.func @transform_5(%arg0: i32) -> (i32, i32) {
    %c0_i32 = arith.constant 0 : i32
    %c0_i32_0 = arith.constant 0 : i32
    %c0_i32_1 = arith.constant 0 : i32
    return %c0_i32, %c0_i32_0 : i32, i32
  }
  func.func @transform_6(%arg0: i32) -> (i32, i32) {
    %c0_i32 = arith.constant 0 : i32
    %c0_i32_0 = arith.constant 0 : i32
    %c0_i32_1 = arith.constant 0 : i32
    return %c0_i32, %c0_i32_0 : i32, i32
  }
  func.func @transform_7(%arg0: i32) -> (i32, i32) {
    %c0_i32 = arith.constant 0 : i32
    %c0_i32_0 = arith.constant 0 : i32
    %c0_i32_1 = arith.constant 0 : i32
    return %c0_i32, %c0_i32_0 : i32, i32
  }
  func.func @transform_8(%arg0: i32) -> (i32, i32) {
    %c0_i32 = arith.constant 0 : i32
    %c0_i32_0 = arith.constant 0 : i32
    %c0_i32_1 = arith.constant 0 : i32
    return %c0_i32, %c0_i32_0 : i32, i32
  }
  func.func @transform_9(%arg0: i32) -> (i32, i32) {
    %c0_i32 = arith.constant 0 : i32
    %c0_i32_0 = arith.constant 0 : i32
    return %arg0, %c0_i32 : i32, i32
  }
}

</mosaic_0001>

<llo_original>
// kernel: tpu_custom_call.1
$region0: #{tpu_custom_call.1}
  #allocation0 [shape = 'u32[]', space=smem, size = 0x4, offset = 0x4, fixed_abs, tag = 'smem constant byte address 0x4 - core index']
  #allocation1 [shape = 'u32[72,128]{1,0:T(1,128)}', space=vmem, size = 0x9000, scoped, tag = 'internal scratch']
  #allocation2 [shape = 'f32[1,1]{1,0:T(1,128)S(1)}', space=vmem, size = 0x200, scoped, tag = 'scoped memory for tpu_custom_call.1']
  %s0 = inlined_call_operand.hbm [shape: f32[32,420], index: 0, kind: input, shape index: {}]
  %s1 = inlined_call_operand.hbm [shape: f32[420,630], index: 1, kind: input, shape index: {}]
  %s2 = inlined_call_operand.hbm [shape: f32[1,630], index: 2, kind: input, shape index: {}]
  %s3 = inlined_call_operand.hbm [shape: f32[630,252], index: 3, kind: input, shape index: {}]
  %s4 = inlined_call_operand.hbm [shape: f32[1,252], index: 4, kind: input, shape index: {}]
  %s5 = inlined_call_operand.hbm [shape: f32[42,96], index: 5, kind: input, shape index: {}]
  %s6 = inlined_call_operand.hbm [shape: f32[1,96], index: 6, kind: input, shape index: {}]
  %s7 = inlined_call_operand.hbm [shape: f32[1,32], index: 7, kind: input, shape index: {}]
  %s8 = inlined_call_operand.<no memory space> [shape: f32[1,1], index: 8, kind: input, shape index: {}]
  %s9 = inlined_call_operand.hbm [shape: f32[32,128], index: 9, kind: output, shape index: {}]
  %s10 = sld [smem:[#allocation0]]
  $region101: #{tpu_custom_call.1} parent=0
    _
  %s12 = ssub.s32 1, %s10
  %s13 = scalar_select 0, %s12, %s10
  %v14 = vstv %s8
  %15 = vst [vmem:[#allocation2] sm:$0x1] %v14
  $region1: #{tpu_custom_call.1} parent=0
    #allocation3 [shape = 'u8[65536]{0}', space=vmem, size = 0x10000, scoped, tag = 'input window, operand 0']
    #allocation4 [shape = 's32[2]{0}', space=sflag, size = 0x8, scoped, tag = 'scoped memory for tpu_custom_call.1']
    #allocation5 [shape = 's32[2]{0}', space=sflag, size = 0x8, scoped, tag = 'scoped memory for tpu_custom_call.1']
    #allocation6 [shape = 'u8[1085440]{0}', space=vmem, size = 0x109000, scoped, tag = 'input window, operand 1, single buffered']
    #allocation7 [shape = 's32[1]{0}', space=sflag, size = 0x4, scoped, tag = 'scoped memory for tpu_custom_call.1']
    #allocation8 [shape = 'u8[2560]{0}', space=vmem, size = 0xc00, scoped, tag = 'input window, operand 2, single buffered']
    #allocation9 [shape = 'u8[647168]{0}', space=vmem, size = 0x9e000, scoped, tag = 'input window, operand 3, single buffered']
    #allocation10 [shape = 's32[1]{0}', space=sflag, size = 0x4, scoped, tag = 'scoped memory for tpu_custom_call.1']
    #allocation11 [shape = 'u8[1024]{0}', space=vmem, size = 0x400, scoped, tag = 'input window, operand 4, single buffered']
    #allocation12 [shape = 'u8[24576]{0}', space=vmem, size = 0x6000, scoped, tag = 'input window, operand 5, single buffered']
    #allocation13 [shape = 's32[1]{0}', space=sflag, size = 0x4, scoped, tag = 'scoped memory for tpu_custom_call.1']
    #allocation14 [shape = 'u8[512]{0}', space=vmem, size = 0x400, scoped, tag = 'input window, operand 6, single buffered']
    #allocation15 [shape = 'u8[512]{0}', space=vmem, size = 0x400, scoped, tag = 'input window, operand 7, single buffered']
    #allocation16 [shape = 's32[1]{0}', space=sflag, size = 0x4, scoped, tag = 'scoped memory for tpu_custom_call.1']
    #allocation17 [shape = 'u8[16384]{0}', space=vmem, size = 0x4000, scoped, tag = 'output window, operand 0']
    %16 = vsyncpa [#allocation4], 0
    %s17 = scalar_lea.sflag [#allocation4], 1
    %18 = vsyncpa %s17, 0
    %19 = vsyncpa [#allocation7], 0
    %20 = vsyncpa [#allocation10], 0
    %21 = vsyncpa [#allocation13], 0
    %22 = vsyncpa [#allocation16], 0
    %23 = vsyncpa [#allocation5], 0
    %s24 = scalar_lea.sflag [#allocation5], 1
    %25 = vsyncpa %s24, 0
    loop: start=0, step=1, limit=4
    $region2: #{tpu_custom_call.1} parent=1 // loop_pre_header
      _
    $region3: #{tpu_custom_call.1} parent=1 // loop_header
      %s27 = sphi 0, %s31
      %p28 = scmp.ge.s32.totalorder %s27, 4
      %s37 = sphi 0, %s39
      %s40 = sphi 0, %s37
      %s41 = sphi 0, %s40
      %s57 = sphi 0, %s41
      %s61 = sphi 0, %s61
      %s63 = sphi 0, %s61
      %s64 = sphi 0, %s63
      %s78 = sphi 0, %s64
      %s82 = sphi 0, %s82
      %s84 = sphi 0, %s82
      %s85 = sphi 0, %s84
      %s99 = sphi 0, %s85
      %s103 = sphi 0, %s103
      %s105 = sphi 0, %s103
      %s106 = sphi 0, %s105
      %s120 = sphi 0, %s106
      %s124 = sphi 0, %s124
      %s126 = sphi 0, %s124
      %s127 = sphi 0, %s126
      %s141 = sphi 0, %s127
      %s145 = sphi 0, %s145
      %s147 = sphi 0, %s145
      %s148 = sphi 0, %s147
      %s162 = sphi 0, %s148
      %s166 = sphi 0, %s166
      %s168 = sphi 0, %s166
      %s169 = sphi 0, %s168
      %s183 = sphi 0, %s169
      %s187 = sphi 0, %s187
      %s189 = sphi 0, %s187
      %s190 = sphi 0, %s189
      %s204 = sphi 0, %s190
      %s208 = sphi 0, %s208
      %s210 = sphi 0, %s208
      %s211 = sphi 0, %s210
      %s225 = sphi 0, %s211
      %s231 = sphi 0, %s233
      %s234 = sphi 0, %s231
      %s235 = sphi 0, %s234
      %s251 = sphi 0, %s235
    $region4: #{tpu_custom_call.1} parent=1 // loop_header_branch
      %30 = sbr.rel (%p28) target = $region8
    $region5: #{tpu_custom_call.1} parent=1 // loop_body
      %s32 = ssub.s32 %s27, 1
      %s33 = ssub.s32 %s27, 2
      %s34 = sadd.s32 %s27, 1
      %s35 = ssub.s32 %s27, %s34
      %p36 = scmp.eq.s32.totalorder %s35, 0
      %s38 = sadd.s32 %s37, 1
      %s39 = scalar_select %p36, %s37, %s38
      %p42 = pneg %p36
      %p43 = scmp.eq.s32.totalorder %s27, 1
      %p44 = por %p42, %p43
      %p45 = scmp.ne.s32.totalorder %s37, %s40
      %p46 = scmp.eq.s32.totalorder %s27, 0
      %p47 = por %p45, %p46
      %p48 = scmp.ne.s32.totalorder %s37, %s40
      %p49 = scmp.eq.s32.totalorder %s32, 1
      %p50 = por %p48, %p49
      %p51 = scmp.ne.s32.totalorder %s40, %s41
      %p52 = scmp.eq.s32.totalorder %s32, 0
      %p53 = por %p51, %p52
      %p54 = scmp.ne.s32.totalorder %s40, %s41
      %p55 = scmp.eq.s32.totalorder %s33, 1
      %p56 = por %p54, %p55
      %p58 = scmp.ne.s32.totalorder %s41, %s57
      %p59 = scmp.eq.s32.totalorder %s33, 0
      %p60 = por %p58, %p59
      %s62 = sadd.s32 %s61, 1
      %p65 = scmp.eq.s32.totalorder %s27, 1
      %p66 = scmp.ne.s32.totalorder %s61, %s63
      %p67 = scmp.eq.s32.totalorder %s27, 0
      %p68 = por %p66, %p67
      %p69 = scmp.ne.s32.totalorder %s61, %s63
      %p70 = scmp.eq.s32.totalorder %s32, 1
      %p71 = por %p69, %p70
      %p72 = scmp.ne.s32.totalorder %s63, %s64
      %p73 = scmp.eq.s32.totalorder %s32, 0
      %p74 = por %p72, %p73
      %p75 = scmp.ne.s32.totalorder %s63, %s64
      %p76 = scmp.eq.s32.totalorder %s33, 1
      %p77 = por %p75, %p76
      %p79 = scmp.ne.s32.totalorder %s64, %s78
      %p80 = scmp.eq.s32.totalorder %s33, 0
      %p81 = por %p79, %p80
      %s83 = sadd.s32 %s82, 1
      %p86 = scmp.eq.s32.totalorder %s27, 1
      %p87 = scmp.ne.s32.totalorder %s82, %s84
      %p88 = scmp.eq.s32.totalorder %s27, 0
      %p89 = por %p87, %p88
      %p90 = scmp.ne.s32.totalorder %s82, %s84
      %p91 = scmp.eq.s32.totalorder %s32, 1
      %p92 = por %p90, %p91
      %p93 = scmp.ne.s32.totalorder %s84, %s85
      %p94 = scmp.eq.s32.totalorder %s32, 0
      %p95 = por %p93, %p94
      %p96 = scmp.ne.s32.totalorder %s84, %s85
      %p97 = scmp.eq.s32.totalorder %s33, 1
      %p98 = por %p96, %p97
      %p100 = scmp.ne.s32.totalorder %s85, %s99
      %p101 = scmp.eq.s32.totalorder %s33, 0
      %p102 = por %p100, %p101
      %s104 = sadd.s32 %s103, 1
      %p107 = scmp.eq.s32.totalorder %s27, 1
      %p108 = scmp.ne.s32.totalorder %s103, %s105
      %p109 = scmp.eq.s32.totalorder %s27, 0
      %p110 = por %p108, %p109
      %p111 = scmp.ne.s32.totalorder %s103, %s105
      %p112 = scmp.eq.s32.totalorder %s32, 1
      %p113 = por %p111, %p112
      %p114 = scmp.ne.s32.totalorder %s105, %s106
      %p115 = scmp.eq.s32.totalorder %s32, 0
      %p116 = por %p114, %p115
      %p117 = scmp.ne.s32.totalorder %s105, %s106
      %p118 = scmp.eq.s32.totalorder %s33, 1
      %p119 = por %p117, %p118
      %p121 = scmp.ne.s32.totalorder %s106, %s120
      %p122 = scmp.eq.s32.totalorder %s33, 0
      %p123 = por %p121, %p122
      %s125 = sadd.s32 %s124, 1
      %p128 = scmp.eq.s32.totalorder %s27, 1
      %p129 = scmp.ne.s32.totalorder %s124, %s126
      %p130 = scmp.eq.s32.totalorder %s27, 0
      %p131 = por %p129, %p130
      %p132 = scmp.ne.s32.totalorder %s124, %s126
      %p133 = scmp.eq.s32.totalorder %s32, 1
      %p134 = por %p132, %p133
      %p135 = scmp.ne.s32.totalorder %s126, %s127
      %p136 = scmp.eq.s32.totalorder %s32, 0
      %p137 = por %p135, %p136
      %p138 = scmp.ne.s32.totalorder %s126, %s127
      %p139 = scmp.eq.s32.totalorder %s33, 1
      %p140 = por %p138, %p139
      %p142 = scmp.ne.s32.totalorder %s127, %s141
      %p143 = scmp.eq.s32.totalorder %s33, 0
      %p144 = por %p142, %p143
      %s146 = sadd.s32 %s145, 1
      %p149 = scmp.eq.s32.totalorder %s27, 1
      %p150 = scmp.ne.s32.totalorder %s145, %s147
      %p151 = scmp.eq.s32.totalorder %s27, 0
      %p152 = por %p150, %p151
      %p153 = scmp.ne.s32.totalorder %s145, %s147
      %p154 = scmp.eq.s32.totalorder %s32, 1
      %p155 = por %p153, %p154
      %p156 = scmp.ne.s32.totalorder %s147, %s148
      %p157 = scmp.eq.s32.totalorder %s32, 0
      %p158 = por %p156, %p157
      %p159 = scmp.ne.s32.totalorder %s147, %s148
      %p160 = scmp.eq.s32.totalorder %s33, 1
      %p161 = por %p159, %p160
      %p163 = scmp.ne.s32.totalorder %s148, %s162
      %p164 = scmp.eq.s32.totalorder %s33, 0
      %p165 = por %p163, %p164
      %s167 = sadd.s32 %s166, 1
      %p170 = scmp.eq.s32.totalorder %s27, 1
      %p171 = scmp.ne.s32.totalorder %s166, %s168
      %p172 = scmp.eq.s32.totalorder %s27, 0
      %p173 = por %p171, %p172
      %p174 = scmp.ne.s32.totalorder %s166, %s168
      %p175 = scmp.eq.s32.totalorder %s32, 1
      %p176 = por %p174, %p175
      %p177 = scmp.ne.s32.totalorder %s168, %s169
      %p178 = scmp.eq.s32.totalorder %s32, 0
      %p179 = por %p177, %p178
      %p180 = scmp.ne.s32.totalorder %s168, %s169
      %p181 = scmp.eq.s32.totalorder %s33, 1
      %p182 = por %p180, %p181
      %p184 = scmp.ne.s32.totalorder %s169, %s183
      %p185 = scmp.eq.s32.totalorder %s33, 0
      %p186 = por %p184, %p185
      %s188 = sadd.s32 %s187, 1
      %p191 = scmp.eq.s32.totalorder %s27, 1
      %p192 = scmp.ne.s32.totalorder %s187, %s189
      %p193 = scmp.eq.s32.totalorder %s27, 0
      %p194 = por %p192, %p193
      %p195 = scmp.ne.s32.totalorder %s187, %s189
      %p196 = scmp.eq.s32.totalorder %s32, 1
      %p197 = por %p195, %p196
      %p198 = scmp.ne.s32.totalorder %s189, %s190
      %p199 = scmp.eq.s32.totalorder %s32, 0
      %p200 = por %p198, %p199
      %p201 = scmp.ne.s32.totalorder %s189, %s190
      %p202 = scmp.eq.s32.totalorder %s33, 1
      %p203 = por %p201, %p202
      %p205 = scmp.ne.s32.totalorder %s190, %s204
      %p206 = scmp.eq.s32.totalorder %s33, 0
      %p207 = por %p205, %p206
      %s209 = sadd.s32 %s208, 1
      %p212 = scmp.eq.s32.totalorder %s27, 1
      %p213 = scmp.ne.s32.totalorder %s208, %s210
      %p214 = scmp.eq.s32.totalorder %s27, 0
      %p215 = por %p213, %p214
      %p216 = scmp.ne.s32.totalorder %s208, %s210
      %p217 = scmp.eq.s32.totalorder %s32, 1
      %p218 = por %p216, %p217
      %p219 = scmp.ne.s32.totalorder %s210, %s211
      %p220 = scmp.eq.s32.totalorder %s32, 0
      %p221 = por %p219, %p220
      %p222 = scmp.ne.s32.totalorder %s210, %s211
      %p223 = scmp.eq.s32.totalorder %s33, 1
      %p224 = por %p222, %p223
      %p226 = scmp.ne.s32.totalorder %s211, %s225
      %p227 = scmp.eq.s32.totalorder %s33, 0
      %p228 = por %p226, %p227
      %s229 = ssub.s32 %s27, %s34
      %p230 = scmp.eq.s32.totalorder %s229, 0
      %s232 = sadd.s32 %s231, 1
      %s233 = scalar_select %p230, %s231, %s232
      %p236 = pneg %p230
      %p237 = scmp.eq.s32.totalorder %s27, 1
      %p238 = por %p236, %p237
      %p239 = scmp.ne.s32.totalorder %s231, %s234
      %p240 = scmp.eq.s32.totalorder %s27, 0
      %p241 = por %p239, %p240
      %p242 = scmp.ne.s32.totalorder %s231, %s234
      %p243 = scmp.eq.s32.totalorder %s32, 1
      %p244 = por %p242, %p243
      %p245 = scmp.ne.s32.totalorder %s234, %s235
      %p246 = scmp.eq.s32.totalorder %s32, 0
      %p247 = por %p245, %p246
      %p248 = scmp.ne.s32.totalorder %s234, %s235
      %p249 = scmp.eq.s32.totalorder %s33, 1
      %p250 = por %p248, %p249
      %p252 = scmp.ne.s32.totalorder %s235, %s251
      %p253 = scmp.eq.s32.totalorder %s33, 0
      %p254 = por %p252, %p253
      %p255 = scmp.le.s32.totalorder 1, %s27
      %p256 = scmp.lt.s32.totalorder %s27, 3
      %p257 = pnand %p255, %p256
      %p258 = pneg %p257
      // Predicated region
      $region9: #{tpu_custom_call.1} parent=5 // pred_check
        _
      $region10: #{tpu_custom_call.1} parent=5 // pred_check_branch
        %260 = sbr.rel (%p257) target = $region12
      $region11: #{tpu_custom_call.1} parent=5 // pred_region
        %s261 = ssub.s32 %s27, 1
        // Predicated region
        $region13: #{tpu_custom_call.1} parent=11 // pred_check
          %p262 = pneg %p74
        $region14: #{tpu_custom_call.1} parent=11 // pred_check_branch
          %264 = sbr.rel (%p262) target = $region16
        $region15: #{tpu_custom_call.1} parent=11 // pred_region
          %266 = vsyncadd [#allocation7], 0
          %s267 = sshll.u32 %s1, 4
          %s268 = int_to_ptr.hbm [resolvable:$true] %s267
          %s269 = sshll.u32 [#allocation6], 4
          %s270 = int_to_ptr.vmem [resolvable:$true] %s269
          %275 = dma.hbm_to_vmem [thread:$0]  %s268, 33920, %s270, [#allocation7], 640, 640, 40
        $region16: #{tpu_custom_call.1} parent=11 // pred_fallthru
          _
        // Predicated region
        $region17: #{tpu_custom_call.1} parent=11 // pred_check
          %p276 = pneg %p95
        $region18: #{tpu_custom_call.1} parent=11 // pred_check_branch
          %278 = sbr.rel (%p276) target = $region20
        $region19: #{tpu_custom_call.1} parent=11 // pred_region
          %280 = vsyncadd [#allocation7], 0
          %s282 = sshll.u32 %s2, 4
          %s283 = int_to_ptr.hbm [resolvable:$true] %s282
          %s284 = sshll.u32 [#allocation8], 4
          %s285 = int_to_ptr.vmem [resolvable:$true] %s284
          %287 = dma.hbm_to_vmem [thread:$0]  %s283, 80, %s285, [#allocation7]
        $region20: #{tpu_custom_call.1} parent=11 // pred_fallthru
          _
        // Predicated region
        $region21: #{tpu_custom_call.1} parent=11 // pred_check
          %p288 = pneg %p116
        $region22: #{tpu_custom_call.1} parent=11 // pred_check_branch
          %290 = sbr.rel (%p288) target = $region24
        $region23: #{tpu_custom_call.1} parent=11 // pred_region
          %292 = vsyncadd [#allocation10], 0
          %s293 = sshll.u32 %s3, 4
          %s294 = int_to_ptr.hbm [resolvable:$true] %s293
          %s295 = sshll.u32 [#allocation9], 4
          %s296 = int_to_ptr.vmem [resolvable:$true] %s295
          %301 = dma.hbm_to_vmem [thread:$0]  %s294, 20224, %s296, [#allocation10], 256, 256, 16
        $region24: #{tpu_custom_call.1} parent=11 // pred_fallthru
          _
        // Predicated region
        $region25: #{tpu_custom_call.1} parent=11 // pred_check
          %p302 = pneg %p137
        $region26: #{tpu_custom_call.1} parent=11 // pred_check_branch
          %304 = sbr.rel (%p302) target = $region28
        $region27: #{tpu_custom_call.1} parent=11 // pred_region
          %306 = vsyncadd [#allocation10], 0
          %s308 = sshll.u32 %s4, 4
          %s309 = int_to_ptr.hbm [resolvable:$true] %s308
          %s310 = sshll.u32 [#allocation11], 4
          %s311 = int_to_ptr.vmem [resolvable:$true] %s310
          %313 = dma.hbm_to_vmem [thread:$0]  %s309, 32, %s311, [#allocation10]
        $region28: #{tpu_custom_call.1} parent=11 // pred_fallthru
          _
        // Predicated region
        $region29: #{tpu_custom_call.1} parent=11 // pred_check
          %p314 = pneg %p158
        $region30: #{tpu_custom_call.1} parent=11 // pred_check_branch
          %316 = sbr.rel (%p314) target = $region32
        $region31: #{tpu_custom_call.1} parent=11 // pred_region
          %318 = vsyncadd [#allocation13], 0
          %s319 = sshll.u32 %s5, 4
          %s320 = int_to_ptr.hbm [resolvable:$true] %s319
          %s321 = sshll.u32 [#allocation12], 4
          %s322 = int_to_ptr.vmem [resolvable:$true] %s321
          %327 = dma.hbm_to_vmem [thread:$0]  %s320, 768, %s322, [#allocation13], 128, 128, 8
        $region32: #{tpu_custom_call.1} parent=11 // pred_fallthru
          _
        // Predicated region
        $region33: #{tpu_custom_call.1} parent=11 // pred_check
          %p328 = pneg %p179
        $region34: #{tpu_custom_call.1} parent=11 // pred_check_branch
          %330 = sbr.rel (%p328) target = $region36
        $region35: #{tpu_custom_call.1} parent=11 // pred_region
          %332 = vsyncadd [#allocation13], 0
          %s334 = sshll.u32 %s6, 4
          %s335 = int_to_ptr.hbm [resolvable:$true] %s334
          %s336 = sshll.u32 [#allocation14], 4
          %s337 = int_to_ptr.vmem [resolvable:$true] %s336
          %339 = dma.hbm_to_vmem [thread:$0]  %s335, 16, %s337, [#allocation13]
        $region36: #{tpu_custom_call.1} parent=11 // pred_fallthru
          _
        // Predicated region
        $region37: #{tpu_custom_call.1} parent=11 // pred_check
          %p340 = pneg %p200
        $region38: #{tpu_custom_call.1} parent=11 // pred_check_branch
          %342 = sbr.rel (%p340) target = $region40
        $region39: #{tpu_custom_call.1} parent=11 // pred_region
          %344 = vsyncadd [#allocation16], 0
          %s346 = sshll.u32 %s7, 4
          %s347 = int_to_ptr.hbm [resolvable:$true] %s346
          %s348 = sshll.u32 [#allocation15], 4
          %s349 = int_to_ptr.vmem [resolvable:$true] %s348
          %351 = dma.hbm_to_vmem [thread:$0]  %s347, 16, %s349, [#allocation16]
        $region40: #{tpu_custom_call.1} parent=11 // pred_fallthru
          _
        // Predicated region
        $region41: #{tpu_custom_call.1} parent=11 // pred_check
          %p352 = pneg %p221
        $region42: #{tpu_custom_call.1} parent=11 // pred_check_branch
          %354 = sbr.rel (%p352) target = $region44
        $region43: #{tpu_custom_call.1} parent=11 // pred_region
          _
        $region44: #{tpu_custom_call.1} parent=11 // pred_fallthru
          _
      $region12: #{tpu_custom_call.1} parent=5 // pred_fallthru
        _
      %p355 = scmp.lt.s32.totalorder %s27, 2
      // Predicated region
      $region45: #{tpu_custom_call.1} parent=5 // pred_check
        %p356 = pneg %p355
      $region46: #{tpu_custom_call.1} parent=5 // pred_check_branch
        %358 = sbr.rel (%p356) target = $region48
      $region47: #{tpu_custom_call.1} parent=5 // pred_region
        // Predicated region
        $region49: #{tpu_custom_call.1} parent=47 // pred_check
          %p359 = pneg %p47
        $region50: #{tpu_custom_call.1} parent=47 // pred_check_branch
          %361 = sbr.rel (%p359) target = $region52
        $region51: #{tpu_custom_call.1} parent=47 // pred_region
          %s362 = sand.u32 %s37, 1
          %s363 = scalar_lea.sflag [#allocation4], %s362
          %s364 = sand.u32 %s37, 1
          %s365 = smul.addr %s364, 64
          %s366 = scalar_lea.vmem [#allocation3], %s365
          %s367 = smul.u32 2, %s27
          %369 = vsyncadd %s363, 0
          %s370 = smul.addr %s367, 4
          %s371 = smul.addr %s370, 8
          %s372 = scalar_lea.hbm %s0, %s371
          %s373 = sshll.u32 %s372, 4
          %s374 = int_to_ptr.hbm [resolvable:$true] %s373
          %s375 = sshll.u32 %s366, 4
          %s376 = int_to_ptr.vmem [resolvable:$true] %s375
          %381 = dma.hbm_to_vmem [thread:$0]  %s374, 1024, %s376, %s363, 512, 512, 32
        $region52: #{tpu_custom_call.1} parent=47 // pred_fallthru
          _
      $region48: #{tpu_custom_call.1} parent=5 // pred_fallthru
        _
      %p382 = scmp.le.s32.totalorder 1, %s27
      %p383 = scmp.lt.s32.totalorder %s27, 3
      %p384 = pnand %p382, %p383
      %p385 = pneg %p384
      // Predicated region
      $region53: #{tpu_custom_call.1} parent=5 // pred_check
        _
      $region54: #{tpu_custom_call.1} parent=5 // pred_check_branch
        %387 = sbr.rel (%p384) target = $region56
      $region55: #{tpu_custom_call.1} parent=5 // pred_region
        %s388 = ssub.s32 %s27, 1
        %s389 = sand.u32 %s40, 1
        %s390 = scalar_lea.sflag [#allocation4], %s389
        %s391 = sand.u32 %s40, 1
        %s392 = smul.addr %s391, 64
        %s393 = scalar_lea.vmem [#allocation3], %s392
        // Predicated region
        $region57: #{tpu_custom_call.1} parent=55 // pred_check
          %p394 = pneg %p53
        $region58: #{tpu_custom_call.1} parent=55 // pred_check_branch
          %396 = sbr.rel (%p394) target = $region60
        $region59: #{tpu_custom_call.1} parent=55 // pred_region
          %398 = dma.done %s390, 1024
        $region60: #{tpu_custom_call.1} parent=55 // pred_fallthru
          _
        // Predicated region
        $region61: #{tpu_custom_call.1} parent=55 // pred_check
          %p399 = pneg %p74
        $region62: #{tpu_custom_call.1} parent=55 // pred_check_branch
          %401 = sbr.rel (%p399) target = $region64
        $region63: #{tpu_custom_call.1} parent=55 // pred_region
          %403 = dma.done [#allocation7], 33920
        $region64: #{tpu_custom_call.1} parent=55 // pred_fallthru
          _
        // Predicated region
        $region65: #{tpu_custom_call.1} parent=55 // pred_check
          %p404 = pneg %p95
        $region66: #{tpu_custom_call.1} parent=55 // pred_check_branch
          %406 = sbr.rel (%p404) target = $region68
        $region67: #{tpu_custom_call.1} parent=55 // pred_region
          %408 = dma.done [#allocation7], 80
        $region68: #{tpu_custom_call.1} parent=55 // pred_fallthru
          _
        // Predicated region
        $region69: #{tpu_custom_call.1} parent=55 // pred_check
          %p409 = pneg %p116
        $region70: #{tpu_custom_call.1} parent=55 // pred_check_branch
          %411 = sbr.rel (%p409) target = $region72
        $region71: #{tpu_custom_call.1} parent=55 // pred_region
          %413 = dma.done [#allocation10], 20224
        $region72: #{tpu_custom_call.1} parent=55 // pred_fallthru
          _
        // Predicated region
        $region73: #{tpu_custom_call.1} parent=55 // pred_check
          %p414 = pneg %p137
        $region74: #{tpu_custom_call.1} parent=55 // pred_check_branch
          %416 = sbr.rel (%p414) target = $region76
        $region75: #{tpu_custom_call.1} parent=55 // pred_region
          %418 = dma.done [#allocation10], 32
        $region76: #{tpu_custom_call.1} parent=55 // pred_fallthru
          _
        // Predicated region
        $region77: #{tpu_custom_call.1} parent=55 // pred_check
          %p419 = pneg %p158
        $region78: #{tpu_custom_call.1} parent=55 // pred_check_branch
          %421 = sbr.rel (%p419) target = $region80
        $region79: #{tpu_custom_call.1} parent=55 // pred_region
          %423 = dma.done [#allocation13], 768
        $region80: #{tpu_custom_call.1} parent=55 // pred_fallthru
          _
        // Predicated region
        $region81: #{tpu_custom_call.1} parent=55 // pred_check
          %p424 = pneg %p179
        $region82: #{tpu_custom_call.1} parent=55 // pred_check_branch
          %426 = sbr.rel (%p424) target = $region84
        $region83: #{tpu_custom_call.1} parent=55 // pred_region
          %428 = dma.done [#allocation13], 16
        $region84: #{tpu_custom_call.1} parent=55 // pred_fallthru
          _
        // Predicated region
        $region85: #{tpu_custom_call.1} parent=55 // pred_check
          %p429 = pneg %p200
        $region86: #{tpu_custom_call.1} parent=55 // pred_check_branch
          %431 = sbr.rel (%p429) target = $region88
        $region87: #{tpu_custom_call.1} parent=55 // pred_region
          %433 = dma.done [#allocation16], 16
        $region88: #{tpu_custom_call.1} parent=55 // pred_fallthru
          _
        %s434 = sand.u32 %s40, 1
        %s435 = scalar_lea.sflag [#allocation4], %s434
        %s436 = sand.u32 %s40, 1
        %s437 = smul.addr %s436, 64
        %s438 = scalar_lea.vmem [#allocation3], %s437
        %p439 = pneg %p53
        %p440 = pneg %p50
        %p441 = pneg %p74
        %p442 = pneg %p71
        %p443 = pneg %p95
        %p444 = pneg %p92
        %p445 = pneg %p116
        %p446 = pneg %p113
        %p447 = pneg %p137
        %p448 = pneg %p134
        %p449 = pneg %p158
        %p450 = pneg %p155
        %p451 = pneg %p179
        %p452 = pneg %p176
        %p453 = pneg %p200
        %p454 = pneg %p197
        %p455 = pneg %p221
        %p456 = pneg %p218
        %p457 = pneg %p247
        %p458 = pneg %p244
        %s459 = sand.u32 %s234, 1
        %s460 = scalar_lea.sflag [#allocation5], %s459
        %s461 = sand.u32 %s234, 1
        %s462 = smul.addr %s461, 16
        %s463 = scalar_lea.vmem [#allocation17], %s462
        %s464 = smul.u32 2, %s32
        %s465 = smul.u32 2, %s32
        %v466 = vld [vmem:[%s393] sm:$0xff]
        %v467 = vld [vmem:[%s393 + $0x8] sm:$0xff]
        %v468 = vld [vmem:[%s393 + $0x10] sm:$0xff]
        %v469 = vld [vmem:[%s393 + $0x18] sm:$0xff]
        %v470 = vld [vmem:[%s393 + $0x20] sm:$0xff]
        %v471 = vld [vmem:[%s393 + $0x28] sm:$0xff]
        %v472 = vld [vmem:[%s393 + $0x30] sm:$0xff]
        %v473 = vld [vmem:[%s393 + $0x38] sm:$0xff]
        %v474 = vld [vmem:[#allocation6] sm:$0xff]
        %v475 = vld [vmem:[#allocation6 + $0x8] sm:$0xff]
        %v476 = vld [vmem:[#allocation6 + $0x10] sm:$0xff]
        %v477 = vld [vmem:[#allocation6 + $0x18] sm:$0xff]
        %v478 = vld [vmem:[#allocation6 + $0x20] sm:$0xff]
        %v479 = vld [vmem:[#allocation6 + $0x28] sm:$0xff]
        %v480 = vld [vmem:[#allocation6 + $0x30] sm:$0xff]
        %v481 = vld [vmem:[#allocation6 + $0x38] sm:$0xff]
        %v482 = vld [vmem:[#allocation6 + $0x40] sm:$0xff]
        %v483 = vld [vmem:[#allocation6 + $0x48] sm:$0xff]
        %v484 = vld [vmem:[#allocation6 + $0x50] sm:$0xff]
        %v485 = vld [vmem:[#allocation6 + $0x58] sm:$0xff]
        %v486 = vld [vmem:[#allocation6 + $0x60] sm:$0xff]
        %v487 = vld [vmem:[#allocation6 + $0x68] sm:$0xff]
        %v488 = vld [vmem:[#allocation6 + $0x70] sm:$0xff]
        %v489 = vld [vmem:[#allocation6 + $0x78] sm:$0xff]
        %v490 = vld [vmem:[#allocation6 + $0x80] sm:$0xff]
        %v491 = vld [vmem:[#allocation6 + $0x88] sm:$0xff]
        %v492 = vld [vmem:[#allocation6 + $0x90] sm:$0xff]
        %v493 = vld [vmem:[#allocation6 + $0x98] sm:$0xff]
        %v494 = vld [vmem:[#allocation6 + $0xa0] sm:$0xff]
        %v495 = vld [vmem:[#allocation6 + $0xa8] sm:$0xff]
        %v496 = vld [vmem:[#allocation6 + $0xb0] sm:$0xff]
        %v497 = vld [vmem:[#allocation6 + $0xb8] sm:$0xff]
        %v498 = vld [vmem:[#allocation6 + $0xc0] sm:$0xff]
        %v499 = vld [vmem:[#allocation6 + $0xc8] sm:$0xff]
        %v500 = vld [vmem:[#allocation6 + $0xd0] sm:$0xff]
        %v501 = vld [vmem:[#allocation6 + $0xd8] sm:$0xff]
        %v502 = vld [vmem:[#allocation6 + $0xe0] sm:$0xff]
        %v503 = vld [vmem:[#allocation6 + $0xe8] sm:$0xff]
        %v504 = vld [vmem:[#allocation6 + $0xf0] sm:$0xff]
        %v505 = vld [vmem:[#allocation6 + $0xf8] sm:$0xff]
        %v506 = vld [vmem:[#allocation6 + $0x100] sm:$0xff]
        %v507 = vld [vmem:[#allocation6 + $0x108] sm:$0xff]
        %v508 = vld [vmem:[#allocation6 + $0x110] sm:$0xff]
        %v509 = vld [vmem:[#allocation6 + $0x118] sm:$0xff]
        %v510 = vld [vmem:[#allocation6 + $0x120] sm:$0xff]
        %v511 = vld [vmem:[#allocation6 + $0x128] sm:$0xff]
        %v512 = vld [vmem:[#allocation6 + $0x130] sm:$0xff]
        %v513 = vld [vmem:[#allocation6 + $0x138] sm:$0xff]
        %v514 = vld [vmem:[#allocation6 + $0x140] sm:$0xff]
        %v515 = vld [vmem:[#allocation6 + $0x148] sm:$0xff]
        %v516 = vld [vmem:[#allocation6 + $0x150] sm:$0xff]
        %v517 = vld [vmem:[#allocation6 + $0x158] sm:$0xff]
        %v518 = vld [vmem:[#allocation6 + $0x160] sm:$0xff]
        %v519 = vld [vmem:[#allocation6 + $0x168] sm:$0xff]
        %v520 = vld [vmem:[#allocation6 + $0x170] sm:$0xff]
        %v521 = vld [vmem:[#allocation6 + $0x178] sm:$0xff]
        %v522 = vld [vmem:[#allocation6 + $0x180] sm:$0xff]
        %v523 = vld [vmem:[#allocation6 + $0x188] sm:$0xff]
        %v524 = vld [vmem:[#allocation6 + $0x190] sm:$0xff]
        %v525 = vld [vmem:[#allocation6 + $0x198] sm:$0xff]
        %v526 = vld [vmem:[#allocation6 + $0x1a0] sm:$0xff]
        %v527 = vld [vmem:[#allocation6 + $0x1a8] sm:$0xff]
        %v528 = vld [vmem:[#allocation6 + $0x1b0] sm:$0xff]
        %v529 = vld [vmem:[#allocation6 + $0x1b8] sm:$0xff]
        %v530 = vld [vmem:[#allocation6 + $0x1c0] sm:$0xff]
        %v531 = vld [vmem:[#allocation6 + $0x1c8] sm:$0xff]
        %v532 = vld [vmem:[#allocation6 + $0x1d0] sm:$0xff]
        %v533 = vld [vmem:[#allocation6 + $0x1d8] sm:$0xff]
        %v534 = vld [vmem:[#allocation6 + $0x1e0] sm:$0xff]
        %v535 = vld [vmem:[#allocation6 + $0x1e8] sm:$0xff]
        %v536 = vld [vmem:[#allocation6 + $0x1f0] sm:$0xff]
        %v537 = vld [vmem:[#allocation6 + $0x1f8] sm:$0xff]
        %v538 = vld [vmem:[#allocation6 + $0x200] sm:$0xff]
        %v539 = vld [vmem:[#allocation6 + $0x208] sm:$0xff]
        %v540 = vld [vmem:[#allocation6 + $0x210] sm:$0xff]
        %v541 = vld [vmem:[#allocation6 + $0x218] sm:$0xff]
        %v542 = vld [vmem:[#allocation6 + $0x220] sm:$0xff]
        %v543 = vld [vmem:[#allocation6 + $0x228] sm:$0xff]
        %v544 = vld [vmem:[#allocation6 + $0x230] sm:$0xff]
        %v545 = vld [vmem:[#allocation6 + $0x238] sm:$0xff]
        %v546 = vld [vmem:[#allocation6 + $0x240] sm:$0xff]
        %v547 = vld [vmem:[#allocation6 + $0x248] sm:$0xff]
        %v548 = vld [vmem:[#allocation6 + $0x250] sm:$0xff]
        %v549 = vld [vmem:[#allocation6 + $0x258] sm:$0xff]
        %v550 = vld [vmem:[#allocation6 + $0x260] sm:$0xff]
        %v551 = vld [vmem:[#allocation6 + $0x268] sm:$0xff]
        %v552 = vld [vmem:[#allocation6 + $0x270] sm:$0xff]
        %v553 = vld [vmem:[#allocation6 + $0x278] sm:$0xff]
        %v554 = vld [vmem:[#allocation6 + $0x280] sm:$0xff]
        %v555 = vld [vmem:[#allocation6 + $0x288] sm:$0xff]
        %v556 = vld [vmem:[#allocation6 + $0x290] sm:$0xff]
        %v557 = vld [vmem:[#allocation6 + $0x298] sm:$0xff]
        %v558 = vld [vmem:[#allocation6 + $0x2a0] sm:$0xff]
        %v559 = vld [vmem:[#allocation6 + $0x2a8] sm:$0xff]
        %v560 = vld [vmem:[#allocation6 + $0x2b0] sm:$0xff]
        %v561 = vld [vmem:[#allocation6 + $0x2b8] sm:$0xff]
        %v562 = vld [vmem:[#allocation6 + $0x2c0] sm:$0xff]
        %v563 = vld [vmem:[#allocation6 + $0x2c8] sm:$0xff]
        %v564 = vld [vmem:[#allocation6 + $0x2d0] sm:$0xff]
        %v565 = vld [vmem:[#allocation6 + $0x2d8] sm:$0xff]
        %v566 = vld [vmem:[#allocation6 + $0x2e0] sm:$0xff]
        %v567 = vld [vmem:[#allocation6 + $0x2e8] sm:$0xff]
        %v568 = vld [vmem:[#allocation6 + $0x2f0] sm:$0xff]
        %v569 = vld [vmem:[#allocation6 + $0x2f8] sm:$0xff]
        %v570 = vld [vmem:[#allocation6 + $0x300] sm:$0xff]
        %v571 = vld [vmem:[#allocation6 + $0x308] sm:$0xff]
        %v572 = vld [vmem:[#allocation6 + $0x310] sm:$0xff]
        %v573 = vld [vmem:[#allocation6 + $0x318] sm:$0xff]
        %v574 = vld [vmem:[#allocation6 + $0x320] sm:$0xff]
        %v575 = vld [vmem:[#allocation6 + $0x328] sm:$0xff]
        %v576 = vld [vmem:[#allocation6 + $0x330] sm:$0xff]
        %v577 = vld [vmem:[#allocation6 + $0x338] sm:$0xff]
        %v578 = vld [vmem:[#allocation6 + $0x340] sm:$0xff]
        %v579 = vld [vmem:[#allocation6 + $0x348] sm:$0xff]
        %v580 = vld [vmem:[#allocation6 + $0x350] sm:$0xff]
        %v581 = vld [vmem:[#allocation6 + $0x358] sm:$0xff]
        %v582 = vld [vmem:[#allocation6 + $0x360] sm:$0xff]
        %v583 = vld [vmem:[#allocation6 + $0x368] sm:$0xff]
        %v584 = vld [vmem:[#allocation6 + $0x370] sm:$0xff]
        %v585 = vld [vmem:[#allocation6 + $0x378] sm:$0xff]
        %v586 = vld [vmem:[#allocation6 + $0x380] sm:$0xff]
        %v587 = vld [vmem:[#allocation6 + $0x388] sm:$0xff]
        %v588 = vld [vmem:[#allocation6 + $0x390] sm:$0xff]
        %v589 = vld [vmem:[#allocation6 + $0x398] sm:$0xff]
        %v590 = vld [vmem:[#allocation6 + $0x3a0] sm:$0xff]
        %v591 = vld [vmem:[#allocation6 + $0x3a8] sm:$0xff]
        %v592 = vld [vmem:[#allocation6 + $0x3b0] sm:$0xff]
        %v593 = vld [vmem:[#allocation6 + $0x3b8] sm:$0xff]
        %v594 = vld [vmem:[#allocation6 + $0x3c0] sm:$0xff]
        %v595 = vld [vmem:[#allocation6 + $0x3c8] sm:$0xff]
        %v596 = vld [vmem:[#allocation6 + $0x3d0] sm:$0xff]
        %v597 = vld [vmem:[#allocation6 + $0x3d8] sm:$0xff]
        %v598 = vld [vmem:[#allocation6 + $0x3e0] sm:$0xff]
        %v599 = vld [vmem:[#allocation6 + $0x3e8] sm:$0xff]
        %v600 = vld [vmem:[#allocation6 + $0x3f0] sm:$0xff]
        %v601 = vld [vmem:[#allocation6 + $0x3f8] sm:$0xff]
        %v602 = vld [vmem:[#allocation6 + $0x400] sm:$0xff]
        %v603 = vld [vmem:[#allocation6 + $0x408] sm:$0xff]
        %v604 = vld [vmem:[#allocation6 + $0x410] sm:$0xff]
        %v605 = vld [vmem:[#allocation6 + $0x418] sm:$0xff]
        %v606 = vld [vmem:[#allocation6 + $0x420] sm:$0xff]
        %v607 = vld [vmem:[#allocation6 + $0x428] sm:$0xff]
        %v608 = vld [vmem:[#allocation6 + $0x430] sm:$0xff]
        %v609 = vld [vmem:[#allocation6 + $0x438] sm:$0xff]
        %v610 = vld [vmem:[#allocation6 + $0x440] sm:$0xff]
        %v611 = vld [vmem:[#allocation6 + $0x448] sm:$0xff]
        %v612 = vld [vmem:[#allocation6 + $0x450] sm:$0xff]
        %v613 = vld [vmem:[#allocation6 + $0x458] sm:$0xff]
        %v614 = vld [vmem:[#allocation6 + $0x460] sm:$0xff]
        %v615 = vld [vmem:[#allocation6 + $0x468] sm:$0xff]
        %v616 = vld [vmem:[#allocation6 + $0x470] sm:$0xff]
        %v617 = vld [vmem:[#allocation6 + $0x478] sm:$0xff]
        %v618 = vld [vmem:[#allocation6 + $0x480] sm:$0xff]
        %v619 = vld [vmem:[#allocation6 + $0x488] sm:$0xff]
        %v620 = vld [vmem:[#allocation6 + $0x490] sm:$0xff]
        %v621 = vld [vmem:[#allocation6 + $0x498] sm:$0xff]
        %v622 = vld [vmem:[#allocation6 + $0x4a0] sm:$0xff]
        %v623 = vld [vmem:[#allocation6 + $0x4a8] sm:$0xff]
        %v624 = vld [vmem:[#allocation6 + $0x4b0] sm:$0xff]
        %v625 = vld [vmem:[#allocation6 + $0x4b8] sm:$0xff]
        %v626 = vld [vmem:[#allocation6 + $0x4c0] sm:$0xff]
        %v627 = vld [vmem:[#allocation6 + $0x4c8] sm:$0xff]
        %v628 = vld [vmem:[#allocation6 + $0x4d0] sm:$0xff]
        %v629 = vld [vmem:[#allocation6 + $0x4d8] sm:$0xff]
        %v630 = vld [vmem:[#allocation6 + $0x4e0] sm:$0xff]
        %v631 = vld [vmem:[#allocation6 + $0x4e8] sm:$0xff]
        %v632 = vld [vmem:[#allocation6 + $0x4f0] sm:$0xff]
        %v633 = vld [vmem:[#allocation6 + $0x4f8] sm:$0xff]
        %v634 = vld [vmem:[#allocation6 + $0x500] sm:$0xff]
        %v635 = vld [vmem:[#allocation6 + $0x508] sm:$0xff]
        %v636 = vld [vmem:[#allocation6 + $0x510] sm:$0xff]
        %v637 = vld [vmem:[#allocation6 + $0x518] sm:$0xff]
        %v638 = vld [vmem:[#allocation6 + $0x520] sm:$0xff]
        %v639 = vld [vmem:[#allocation6 + $0x528] sm:$0xff]
        %v640 = vld [vmem:[#allocation6 + $0x530] sm:$0xff]
        %v641 = vld [vmem:[#allocation6 + $0x538] sm:$0xff]
        %v642 = vld [vmem:[#allocation6 + $0x540] sm:$0xff]
        %v643 = vld [vmem:[#allocation6 + $0x548] sm:$0xff]
        %v644 = vld [vmem:[#allocation6 + $0x550] sm:$0xff]
        %v645 = vld [vmem:[#allocation6 + $0x558] sm:$0xff]
        %v646 = vld [vmem:[#allocation6 + $0x560] sm:$0xff]
        %v647 = vld [vmem:[#allocation6 + $0x568] sm:$0xff]
        %v648 = vld [vmem:[#allocation6 + $0x570] sm:$0xff]
        %v649 = vld [vmem:[#allocation6 + $0x578] sm:$0xff]
        %v650 = vld [vmem:[#allocation6 + $0x580] sm:$0xff]
        %v651 = vld [vmem:[#allocation6 + $0x588] sm:$0xff]
        %v652 = vld [vmem:[#allocation6 + $0x590] sm:$0xff]
        %v653 = vld [vmem:[#allocation6 + $0x598] sm:$0xff]
        %v654 = vld [vmem:[#allocation6 + $0x5a0] sm:$0xff]
        %v655 = vld [vmem:[#allocation6 + $0x5a8] sm:$0xff]
        %v656 = vld [vmem:[#allocation6 + $0x5b0] sm:$0xff]
        %v657 = vld [vmem:[#allocation6 + $0x5b8] sm:$0xff]
        %v658 = vld [vmem:[#allocation6 + $0x5c0] sm:$0xff]
        %v659 = vld [vmem:[#allocation6 + $0x5c8] sm:$0xff]
        %v660 = vld [vmem:[#allocation6 + $0x5d0] sm:$0xff]
        %v661 = vld [vmem:[#allocation6 + $0x5d8] sm:$0xff]
        %v662 = vld [vmem:[#allocation6 + $0x5e0] sm:$0xff]
        %v663 = vld [vmem:[#allocation6 + $0x5e8] sm:$0xff]
        %v664 = vld [vmem:[#allocation6 + $0x5f0] sm:$0xff]
        %v665 = vld [vmem:[#allocation6 + $0x5f8] sm:$0xff]
        %v666 = vld [vmem:[#allocation6 + $0x600] sm:$0xff]
        %v667 = vld [vmem:[#allocation6 + $0x608] sm:$0xff]
        %v668 = vld [vmem:[#allocation6 + $0x610] sm:$0xff]
        %v669 = vld [vmem:[#allocation6 + $0x618] sm:$0xff]
        %v670 = vld [vmem:[#allocation6 + $0x620] sm:$0xff]
        %v671 = vld [vmem:[#allocation6 + $0x628] sm:$0xff]
        %v672 = vld [vmem:[#allocation6 + $0x630] sm:$0xff]
        %v673 = vld [vmem:[#allocation6 + $0x638] sm:$0xff]
        %v674 = vld [vmem:[#allocation6 + $0x640] sm:$0xff]
        %v675 = vld [vmem:[#allocation6 + $0x648] sm:$0xff]
        %v676 = vld [vmem:[#allocation6 + $0x650] sm:$0xff]
        %v677 = vld [vmem:[#allocation6 + $0x658] sm:$0xff]
        %v678 = vld [vmem:[#allocation6 + $0x660] sm:$0xff]
        %v679 = vld [vmem:[#allocation6 + $0x668] sm:$0xff]
        %v680 = vld [vmem:[#allocation6 + $0x670] sm:$0xff]
        %v681 = vld [vmem:[#allocation6 + $0x678] sm:$0xff]
        %v682 = vld [vmem:[#allocation6 + $0x680] sm:$0xff]
        %v683 = vld [vmem:[#allocation6 + $0x688] sm:$0xff]
        %v684 = vld [vmem:[#allocation6 + $0x690] sm:$0xff]
        %v685 = vld [vmem:[#allocation6 + $0x698] sm:$0xff]
        %v686 = vld [vmem:[#allocation6 + $0x6a0] sm:$0xff]
        %v687 = vld [vmem:[#allocation6 + $0x6a8] sm:$0xff]
        %v688 = vld [vmem:[#allocation6 + $0x6b0] sm:$0xff]
        %v689 = vld [vmem:[#allocation6 + $0x6b8] sm:$0xff]
        %v690 = vld [vmem:[#allocation6 + $0x6c0] sm:$0xff]
        %v691 = vld [vmem:[#allocation6 + $0x6c8] sm:$0xff]
        %v692 = vld [vmem:[#allocation6 + $0x6d0] sm:$0xff]
        %v693 = vld [vmem:[#allocation6 + $0x6d8] sm:$0xff]
        %v694 = vld [vmem:[#allocation6 + $0x6e0] sm:$0xff]
        %v695 = vld [vmem:[#allocation6 + $0x6e8] sm:$0xff]
        %v696 = vld [vmem:[#allocation6 + $0x6f0] sm:$0xff]
        %v697 = vld [vmem:[#allocation6 + $0x6f8] sm:$0xff]
        %v698 = vld [vmem:[#allocation6 + $0x700] sm:$0xff]
        %v699 = vld [vmem:[#allocation6 + $0x708] sm:$0xff]
        %v700 = vld [vmem:[#allocation6 + $0x710] sm:$0xff]
        %v701 = vld [vmem:[#allocation6 + $0x718] sm:$0xff]
        %v702 = vld [vmem:[#allocation6 + $0x720] sm:$0xff]
        %v703 = vld [vmem:[#allocation6 + $0x728] sm:$0xff]
        %v704 = vld [vmem:[#allocation6 + $0x730] sm:$0xff]
        %v705 = vld [vmem:[#allocation6 + $0x738] sm:$0xff]
        %v706 = vld [vmem:[#allocation6 + $0x740] sm:$0xff]
        %v707 = vld [vmem:[#allocation6 + $0x748] sm:$0xff]
        %v708 = vld [vmem:[#allocation6 + $0x750] sm:$0xff]
        %v709 = vld [vmem:[#allocation6 + $0x758] sm:$0xff]
        %v710 = vld [vmem:[#allocation6 + $0x760] sm:$0xff]
        %v711 = vld [vmem:[#allocation6 + $0x768] sm:$0xff]
        %v712 = vld [vmem:[#allocation6 + $0x770] sm:$0xff]
        %v713 = vld [vmem:[#allocation6 + $0x778] sm:$0xff]
        %v714 = vld [vmem:[#allocation6 + $0x780] sm:$0xff]
        %v715 = vld [vmem:[#allocation6 + $0x788] sm:$0xff]
        %v716 = vld [vmem:[#allocation6 + $0x790] sm:$0xff]
        %v717 = vld [vmem:[#allocation6 + $0x798] sm:$0xff]
        %v718 = vld [vmem:[#allocation6 + $0x7a0] sm:$0xff]
        %v719 = vld [vmem:[#allocation6 + $0x7a8] sm:$0xff]
        %v720 = vld [vmem:[#allocation6 + $0x7b0] sm:$0xff]
        %v721 = vld [vmem:[#allocation6 + $0x7b8] sm:$0xff]
        %v722 = vld [vmem:[#allocation6 + $0x7c0] sm:$0xff]
        %v723 = vld [vmem:[#allocation6 + $0x7c8] sm:$0xff]
        %v724 = vld [vmem:[#allocation6 + $0x7d0] sm:$0xff]
        %v725 = vld [vmem:[#allocation6 + $0x7d8] sm:$0xff]
        %v726 = vld [vmem:[#allocation6 + $0x7e0] sm:$0xff]
        %v727 = vld [vmem:[#allocation6 + $0x7e8] sm:$0xff]
        %v728 = vld [vmem:[#allocation6 + $0x7f0] sm:$0xff]
        %v729 = vld [vmem:[#allocation6 + $0x7f8] sm:$0xff]
        %v730 = vld [vmem:[#allocation6 + $0x800] sm:$0xff]
        %v731 = vld [vmem:[#allocation6 + $0x808] sm:$0xff]
        %v732 = vld [vmem:[#allocation6 + $0x810] sm:$0xff]
        %v733 = vld [vmem:[#allocation6 + $0x818] sm:$0xff]
        %v734 = vld [vmem:[#allocation6 + $0x820] sm:$0xf]
        %v735 = vld [vmem:[#allocation6 + $0x828] sm:$0xf]
        %v736 = vld [vmem:[#allocation6 + $0x830] sm:$0xf]
        %v737 = vld [vmem:[#allocation6 + $0x838] sm:$0xf]
        %v738 = vld [vmem:[#allocation6 + $0x840] sm:$0xf]
        %v739 = vld [vmem:[#allocation8] sm:$0x1f]
        %v741 = vperm.slane %v739, 0
        %v742 = vperm.slane %v739, 1
        %v743 = vperm.slane %v739, 2
        %v744 = vperm.slane %v739, 3
        %v745 = vperm.slane %v739, 4
        %vm751 = vcmask 293888
        %v753 = vsel %vm751, %v469, 0
        %v756 = vsel %vm751, %v473, 0
        %vm758 = vcmask 1043456
        %v760 = vsel %vm758, %v734, 0
        %v763 = vsel %vm758, %v735, 0
        %v766 = vsel %vm758, %v736, 0
        %v769 = vsel %vm758, %v737, 0
        %v772 = vsel %vm758, %v738, 0
        %774 = vmatpush.msra.mxu0 %v549
        %775 = vmatpush.msra.mxu0 %v544
        %776 = vmatpush.msra.mxu0 %v539
        %777 = vmatpush.msra.mxu0 %v534
        %778 = vmatpush.msra.mxu0 %v529
        %779 = vmatpush.msra.mxu0 %v524
        %780 = vmatpush.msra.mxu0 %v519
        %781 = vmatpush.msra.mxu0 %v514
        %782 = vmatpush.msra.mxu0 %v509
        %783 = vmatpush.msra.mxu0 %v504
        %784 = vmatpush.msra.mxu0 %v499
        %785 = vmatpush.msra.mxu0 %v494
        %786 = vmatpush.msra.mxu0 %v489
        %787 = vmatpush.msra.mxu0 %v484
        %788 = vmatpush.msra.mxu0 %v479
        %789 = vmatpush.msra.mxu0 %v474
        %790 = vmatmul.f32.gmra.mxu0 %v466
        %v791 = vpop.f32.mrf.mxu0
        %v792 = vadd.f32 %v741, %v791
        %793 = vmatmul.f32.gmra.mxu0 %v470
        %v794 = vpop.f32.mrf.mxu0
        %v795 = vadd.f32 %v741, %v794
        %796 = vdwg.mxu0
        %797 = vmatpush.msra.mxu0 %v629
        %798 = vmatpush.msra.mxu0 %v624
        %799 = vmatpush.msra.mxu0 %v619
        %800 = vmatpush.msra.mxu0 %v614
        %801 = vmatpush.msra.mxu0 %v609
        %802 = vmatpush.msra.mxu0 %v604
        %803 = vmatpush.msra.mxu0 %v599
        %804 = vmatpush.msra.mxu0 %v594
        %805 = vmatpush.msra.mxu0 %v589
        %806 = vmatpush.msra.mxu0 %v584
        %807 = vmatpush.msra.mxu0 %v579
        %808 = vmatpush.msra.mxu0 %v574
        %809 = vmatpush.msra.mxu0 %v569
        %810 = vmatpush.msra.mxu0 %v564
        %811 = vmatpush.msra.mxu0 %v559
        %812 = vmatpush.msra.mxu0 %v554
        %813 = vmatmul.f32.gmra.mxu0 %v467
        %v814 = vpop.f32.mrf.mxu0
        %v815 = vadd.f32 %v792, %v814
        %816 = vmatmul.f32.gmra.mxu0 %v471
        %v817 = vpop.f32.mrf.mxu0
        %v818 = vadd.f32 %v795, %v817
        %819 = vdwg.mxu0
        %820 = vmatpush.msra.mxu0 %v709
        %821 = vmatpush.msra.mxu0 %v704
        %822 = vmatpush.msra.mxu0 %v699
        %823 = vmatpush.msra.mxu0 %v694
        %824 = vmatpush.msra.mxu0 %v689
        %825 = vmatpush.msra.mxu0 %v684
        %826 = vmatpush.msra.mxu0 %v679
        %827 = vmatpush.msra.mxu0 %v674
        %828 = vmatpush.msra.mxu0 %v669
        %829 = vmatpush.msra.mxu0 %v664
        %830 = vmatpush.msra.mxu0 %v659
        %831 = vmatpush.msra.mxu0 %v654
        %832 = vmatpush.msra.mxu0 %v649
        %833 = vmatpush.msra.mxu0 %v644
        %834 = vmatpush.msra.mxu0 %v639
        %835 = vmatpush.msra.mxu0 %v634
        %836 = vmatmul.f32.gmra.mxu0 %v468
        %v837 = vpop.f32.mrf.mxu0
        %v838 = vadd.f32 %v815, %v837
        %839 = vmatmul.f32.gmra.mxu0 %v472
        %v840 = vpop.f32.mrf.mxu0
        %v841 = vadd.f32 %v818, %v840
        %842 = vdwg.mxu0
        %843 = vmatpush.msra.mxu0 0.0
        %844 = vmatpush.msra.mxu0 0.0
        %845 = vmatpush.msra.mxu0 0.0
        %846 = vmatpush.msra.mxu0 0.0
        %847 = vmatpush.msra.mxu0 0.0
        %848 = vmatpush.msra.mxu0 0.0
        %849 = vmatpush.msra.mxu0 0.0
        %850 = vmatpush.msra.mxu0 0.0
        %851 = vmatpush.msra.mxu0 0.0
        %852 = vmatpush.msra.mxu0 0.0
        %853 = vmatpush.msra.mxu0 0.0
        %854 = vmatpush.msra.mxu0 %v760
        %855 = vmatpush.msra.mxu0 %v729
        %856 = vmatpush.msra.mxu0 %v724
        %857 = vmatpush.msra.mxu0 %v719
        %858 = vmatpush.msra.mxu0 %v714
        %859 = vmatmul.f32.gmra.mxu0 %v753
        %v860 = vpop.f32.mrf.mxu0
        %v861 = vadd.f32 %v838, %v860
        %862 = vmatmul.f32.gmra.mxu0 %v756
        %v863 = vpop.f32.mrf.mxu0
        %v864 = vadd.f32 %v841, %v863
        %865 = vdwg.mxu0
        %866 = vmatpush.msra.mxu0 %v550
        %867 = vmatpush.msra.mxu0 %v545
        %868 = vmatpush.msra.mxu0 %v540
        %869 = vmatpush.msra.mxu0 %v535
        %870 = vmatpush.msra.mxu0 %v530
        %871 = vmatpush.msra.mxu0 %v525
        %872 = vmatpush.msra.mxu0 %v520
        %873 = vmatpush.msra.mxu0 %v515
        %874 = vmatpush.msra.mxu0 %v510
        %875 = vmatpush.msra.mxu0 %v505
        %876 = vmatpush.msra.mxu0 %v500
        %877 = vmatpush.msra.mxu0 %v495
        %878 = vmatpush.msra.mxu0 %v490
        %879 = vmatpush.msra.mxu0 %v485
        %880 = vmatpush.msra.mxu0 %v480
        %881 = vmatpush.msra.mxu0 %v475
        %882 = vmatmul.f32.gmra.mxu0 %v466
        %v883 = vpop.f32.mrf.mxu0
        %v884 = vadd.f32 %v742, %v883
        %885 = vmatmul.f32.gmra.mxu0 %v470
        %v886 = vpop.f32.mrf.mxu0
        %v887 = vadd.f32 %v742, %v886
        %888 = vdwg.mxu0
        %889 = vmatpush.msra.mxu0 %v630
        %890 = vmatpush.msra.mxu0 %v625
        %891 = vmatpush.msra.mxu0 %v620
        %892 = vmatpush.msra.mxu0 %v615
        %893 = vmatpush.msra.mxu0 %v610
        %894 = vmatpush.msra.mxu0 %v605
        %895 = vmatpush.msra.mxu0 %v600
        %896 = vmatpush.msra.mxu0 %v595
        %897 = vmatpush.msra.mxu0 %v590
        %898 = vmatpush.msra.mxu0 %v585
        %899 = vmatpush.msra.mxu0 %v580
        %900 = vmatpush.msra.mxu0 %v575
        %901 = vmatpush.msra.mxu0 %v570
        %902 = vmatpush.msra.mxu0 %v565
        %903 = vmatpush.msra.mxu0 %v560
        %904 = vmatpush.msra.mxu0 %v555
        %905 = vmatmul.f32.gmra.mxu0 %v467
        %v906 = vpop.f32.mrf.mxu0
        %v907 = vadd.f32 %v884, %v906
        %908 = vmatmul.f32.gmra.mxu0 %v471
        %v909 = vpop.f32.mrf.mxu0
        %v910 = vadd.f32 %v887, %v909
        %911 = vdwg.mxu0
        %912 = vmatpush.msra.mxu0 %v710
        %913 = vmatpush.msra.mxu0 %v705
        %914 = vmatpush.msra.mxu0 %v700
        %915 = vmatpush.msra.mxu0 %v695
        %916 = vmatpush.msra.mxu0 %v690
        %917 = vmatpush.msra.mxu0 %v685
        %918 = vmatpush.msra.mxu0 %v680
        %919 = vmatpush.msra.mxu0 %v675
        %920 = vmatpush.msra.mxu0 %v670
        %921 = vmatpush.msra.mxu0 %v665
        %922 = vmatpush.msra.mxu0 %v660
        %923 = vmatpush.msra.mxu0 %v655
        %924 = vmatpush.msra.mxu0 %v650
        %925 = vmatpush.msra.mxu0 %v645
        %926 = vmatpush.msra.mxu0 %v640
        %927 = vmatpush.msra.mxu0 %v635
        %928 = vmatmul.f32.gmra.mxu0 %v468
        %v929 = vpop.f32.mrf.mxu0
        %v930 = vadd.f32 %v907, %v929
        %931 = vmatmul.f32.gmra.mxu0 %v472
        %v932 = vpop.f32.mrf.mxu0
        %v933 = vadd.f32 %v910, %v932
        %934 = vdwg.mxu0
        %935 = vmatpush.msra.mxu0 0.0
        %936 = vmatpush.msra.mxu0 0.0
        %937 = vmatpush.msra.mxu0 0.0
        %938 = vmatpush.msra.mxu0 0.0
        %939 = vmatpush.msra.mxu0 0.0
        %940 = vmatpush.msra.mxu0 0.0
        %941 = vmatpush.msra.mxu0 0.0
        %942 = vmatpush.msra.mxu0 0.0
        %943 = vmatpush.msra.mxu0 0.0
        %944 = vmatpush.msra.mxu0 0.0
        %945 = vmatpush.msra.mxu0 0.0
        %946 = vmatpush.msra.mxu0 %v763
        %947 = vmatpush.msra.mxu0 %v730
        %948 = vmatpush.msra.mxu0 %v725
        %949 = vmatpush.msra.mxu0 %v720
        %950 = vmatpush.msra.mxu0 %v715
        %951 = vmatmul.f32.gmra.mxu0 %v753
        %v952 = vpop.f32.mrf.mxu0
        %v953 = vadd.f32 %v930, %v952
        %954 = vmatmul.f32.gmra.mxu0 %v756
        %v955 = vpop.f32.mrf.mxu0
        %v956 = vadd.f32 %v933, %v955
        %957 = vdwg.mxu0
        %958 = vmatpush.msra.mxu0 %v551
        %959 = vmatpush.msra.mxu0 %v546
        %960 = vmatpush.msra.mxu0 %v541
        %961 = vmatpush.msra.mxu0 %v536
        %962 = vmatpush.msra.mxu0 %v531
        %963 = vmatpush.msra.mxu0 %v526
        %964 = vmatpush.msra.mxu0 %v521
        %965 = vmatpush.msra.mxu0 %v516
        %966 = vmatpush.msra.mxu0 %v511
        %967 = vmatpush.msra.mxu0 %v506
        %968 = vmatpush.msra.mxu0 %v501
        %969 = vmatpush.msra.mxu0 %v496
        %970 = vmatpush.msra.mxu0 %v491
        %971 = vmatpush.msra.mxu0 %v486
        %972 = vmatpush.msra.mxu0 %v481
        %973 = vmatpush.msra.mxu0 %v476
        %974 = vmatmul.f32.gmra.mxu0 %v466
        %v975 = vpop.f32.mrf.mxu0
        %v976 = vadd.f32 %v743, %v975
        %977 = vmatmul.f32.gmra.mxu0 %v470
        %v978 = vpop.f32.mrf.mxu0
        %v979 = vadd.f32 %v743, %v978
        %980 = vdwg.mxu0
        %981 = vmatpush.msra.mxu0 %v631
        %982 = vmatpush.msra.mxu0 %v626
        %983 = vmatpush.msra.mxu0 %v621
        %984 = vmatpush.msra.mxu0 %v616
        %985 = vmatpush.msra.mxu0 %v611
        %986 = vmatpush.msra.mxu0 %v606
        %987 = vmatpush.msra.mxu0 %v601
        %988 = vmatpush.msra.mxu0 %v596
        %989 = vmatpush.msra.mxu0 %v591
        %990 = vmatpush.msra.mxu0 %v586
        %991 = vmatpush.msra.mxu0 %v581
        %992 = vmatpush.msra.mxu0 %v576
        %993 = vmatpush.msra.mxu0 %v571
        %994 = vmatpush.msra.mxu0 %v566
        %995 = vmatpush.msra.mxu0 %v561
        %996 = vmatpush.msra.mxu0 %v556
        %997 = vmatmul.f32.gmra.mxu0 %v467
        %v998 = vpop.f32.mrf.mxu0
        %v999 = vadd.f32 %v976, %v998
        %1000 = vmatmul.f32.gmra.mxu0 %v471
        %v1001 = vpop.f32.mrf.mxu0
        %v1002 = vadd.f32 %v979, %v1001
        %1003 = vdwg.mxu0
        %1004 = vmatpush.msra.mxu0 %v711
        %1005 = vmatpush.msra.mxu0 %v706
        %1006 = vmatpush.msra.mxu0 %v701
        %1007 = vmatpush.msra.mxu0 %v696
        %1008 = vmatpush.msra.mxu0 %v691
        %1009 = vmatpush.msra.mxu0 %v686
        %1010 = vmatpush.msra.mxu0 %v681
        %1011 = vmatpush.msra.mxu0 %v676
        %1012 = vmatpush.msra.mxu0 %v671
        %1013 = vmatpush.msra.mxu0 %v666
        %1014 = vmatpush.msra.mxu0 %v661
        %1015 = vmatpush.msra.mxu0 %v656
        %1016 = vmatpush.msra.mxu0 %v651
        %1017 = vmatpush.msra.mxu0 %v646
        %1018 = vmatpush.msra.mxu0 %v641
        %1019 = vmatpush.msra.mxu0 %v636
        %1020 = vmatmul.f32.gmra.mxu0 %v468
        %v1021 = vpop.f32.mrf.mxu0
        %v1022 = vadd.f32 %v999, %v1021
        %1023 = vmatmul.f32.gmra.mxu0 %v472
        %v1024 = vpop.f32.mrf.mxu0
        %v1025 = vadd.f32 %v1002, %v1024
        %1026 = vdwg.mxu0
        %1027 = vmatpush.msra.mxu0 0.0
        %1028 = vmatpush.msra.mxu0 0.0
        %1029 = vmatpush.msra.mxu0 0.0
        %1030 = vmatpush.msra.mxu0 0.0
        %1031 = vmatpush.msra.mxu0 0.0
        %1032 = vmatpush.msra.mxu0 0.0
        %1033 = vmatpush.msra.mxu0 0.0
        %1034 = vmatpush.msra.mxu0 0.0
        %1035 = vmatpush.msra.mxu0 0.0
        %1036 = vmatpush.msra.mxu0 0.0
        %1037 = vmatpush.msra.mxu0 0.0
        %1038 = vmatpush.msra.mxu0 %v766
        %1039 = vmatpush.msra.mxu0 %v731
        %1040 = vmatpush.msra.mxu0 %v726
        %1041 = vmatpush.msra.mxu0 %v721
        %1042 = vmatpush.msra.mxu0 %v716
        %1043 = vmatmul.f32.gmra.mxu0 %v753
        %v1044 = vpop.f32.mrf.mxu0
        %v1045 = vadd.f32 %v1022, %v1044
        %1046 = vmatmul.f32.gmra.mxu0 %v756
        %v1047 = vpop.f32.mrf.mxu0
        %v1048 = vadd.f32 %v1025, %v1047
        %1049 = vdwg.mxu0
        %1050 = vmatpush.msra.mxu0 %v552
        %1051 = vmatpush.msra.mxu0 %v547
        %1052 = vmatpush.msra.mxu0 %v542
        %1053 = vmatpush.msra.mxu0 %v537
        %1054 = vmatpush.msra.mxu0 %v532
        %1055 = vmatpush.msra.mxu0 %v527
        %1056 = vmatpush.msra.mxu0 %v522
        %1057 = vmatpush.msra.mxu0 %v517
        %1058 = vmatpush.msra.mxu0 %v512
        %1059 = vmatpush.msra.mxu0 %v507
        %1060 = vmatpush.msra.mxu0 %v502
        %1061 = vmatpush.msra.mxu0 %v497
        %1062 = vmatpush.msra.mxu0 %v492
        %1063 = vmatpush.msra.mxu0 %v487
        %1064 = vmatpush.msra.mxu0 %v482
        %1065 = vmatpush.msra.mxu0 %v477
        %1066 = vmatmul.f32.gmra.mxu0 %v466
        %v1067 = vpop.f32.mrf.mxu0
        %v1068 = vadd.f32 %v744, %v1067
        %1069 = vmatmul.f32.gmra.mxu0 %v470
        %v1070 = vpop.f32.mrf.mxu0
        %v1071 = vadd.f32 %v744, %v1070
        %1072 = vdwg.mxu0
        %1073 = vmatpush.msra.mxu0 %v632
        %1074 = vmatpush.msra.mxu0 %v627
        %1075 = vmatpush.msra.mxu0 %v622
        %1076 = vmatpush.msra.mxu0 %v617
        %1077 = vmatpush.msra.mxu0 %v612
        %1078 = vmatpush.msra.mxu0 %v607
        %1079 = vmatpush.msra.mxu0 %v602
        %1080 = vmatpush.msra.mxu0 %v597
        %1081 = vmatpush.msra.mxu0 %v592
        %1082 = vmatpush.msra.mxu0 %v587
        %1083 = vmatpush.msra.mxu0 %v582
        %1084 = vmatpush.msra.mxu0 %v577
        %1085 = vmatpush.msra.mxu0 %v572
        %1086 = vmatpush.msra.mxu0 %v567
        %1087 = vmatpush.msra.mxu0 %v562
        %1088 = vmatpush.msra.mxu0 %v557
        %1089 = vmatmul.f32.gmra.mxu0 %v467
        %v1090 = vpop.f32.mrf.mxu0
        %v1091 = vadd.f32 %v1068, %v1090
        %1092 = vmatmul.f32.gmra.mxu0 %v471
        %v1093 = vpop.f32.mrf.mxu0
        %v1094 = vadd.f32 %v1071, %v1093
        %1095 = vdwg.mxu0
        %1096 = vmatpush.msra.mxu0 %v712
        %1097 = vmatpush.msra.mxu0 %v707
        %1098 = vmatpush.msra.mxu0 %v702
        %1099 = vmatpush.msra.mxu0 %v697
        %1100 = vmatpush.msra.mxu0 %v692
        %1101 = vmatpush.msra.mxu0 %v687
        %1102 = vmatpush.msra.mxu0 %v682
        %1103 = vmatpush.msra.mxu0 %v677
        %1104 = vmatpush.msra.mxu0 %v672
        %1105 = vmatpush.msra.mxu0 %v667
        %1106 = vmatpush.msra.mxu0 %v662
        %1107 = vmatpush.msra.mxu0 %v657
        %1108 = vmatpush.msra.mxu0 %v652
        %1109 = vmatpush.msra.mxu0 %v647
        %1110 = vmatpush.msra.mxu0 %v642
        %1111 = vmatpush.msra.mxu0 %v637
        %1112 = vmatmul.f32.gmra.mxu0 %v468
        %v1113 = vpop.f32.mrf.mxu0
        %v1114 = vadd.f32 %v1091, %v1113
        %1115 = vmatmul.f32.gmra.mxu0 %v472
        %v1116 = vpop.f32.mrf.mxu0
        %v1117 = vadd.f32 %v1094, %v1116
        %1118 = vdwg.mxu0
        %1119 = vmatpush.msra.mxu0 0.0
        %1120 = vmatpush.msra.mxu0 0.0
        %1121 = vmatpush.msra.mxu0 0.0
        %1122 = vmatpush.msra.mxu0 0.0
        %1123 = vmatpush.msra.mxu0 0.0
        %1124 = vmatpush.msra.mxu0 0.0
        %1125 = vmatpush.msra.mxu0 0.0
        %1126 = vmatpush.msra.mxu0 0.0
        %1127 = vmatpush.msra.mxu0 0.0
        %1128 = vmatpush.msra.mxu0 0.0
        %1129 = vmatpush.msra.mxu0 0.0
        %1130 = vmatpush.msra.mxu0 %v769
        %1131 = vmatpush.msra.mxu0 %v732
        %1132 = vmatpush.msra.mxu0 %v727
        %1133 = vmatpush.msra.mxu0 %v722
        %1134 = vmatpush.msra.mxu0 %v717
        %1135 = vmatmul.f32.gmra.mxu0 %v753
        %v1136 = vpop.f32.mrf.mxu0
        %v1137 = vadd.f32 %v1114, %v1136
        %1138 = vmatmul.f32.gmra.mxu0 %v756
        %v1139 = vpop.f32.mrf.mxu0
        %v1140 = vadd.f32 %v1117, %v1139
        %1141 = vdwg.mxu0
        %1142 = vmatpush.msra.mxu0 %v553
        %1143 = vmatpush.msra.mxu0 %v548
        %1144 = vmatpush.msra.mxu0 %v543
        %1145 = vmatpush.msra.mxu0 %v538
        %1146 = vmatpush.msra.mxu0 %v533
        %1147 = vmatpush.msra.mxu0 %v528
        %1148 = vmatpush.msra.mxu0 %v523
        %1149 = vmatpush.msra.mxu0 %v518
        %1150 = vmatpush.msra.mxu0 %v513
        %1151 = vmatpush.msra.mxu0 %v508
        %1152 = vmatpush.msra.mxu0 %v503
        %1153 = vmatpush.msra.mxu0 %v498
        %1154 = vmatpush.msra.mxu0 %v493
        %1155 = vmatpush.msra.mxu0 %v488
        %1156 = vmatpush.msra.mxu0 %v483
        %1157 = vmatpush.msra.mxu0 %v478
        %1158 = vmatmul.f32.gmra.mxu0 %v466
        %v1159 = vpop.f32.mrf.mxu0
        %v1160 = vadd.f32 %v745, %v1159
        %1161 = vmatmul.f32.gmra.mxu0 %v470
        %v1162 = vpop.f32.mrf.mxu0
        %v1163 = vadd.f32 %v745, %v1162
        %1164 = vdwg.mxu0
        %1165 = vmatpush.msra.mxu0 %v633
        %1166 = vmatpush.msra.mxu0 %v628
        %1167 = vmatpush.msra.mxu0 %v623
        %1168 = vmatpush.msra.mxu0 %v618
        %1169 = vmatpush.msra.mxu0 %v613
        %1170 = vmatpush.msra.mxu0 %v608
        %1171 = vmatpush.msra.mxu0 %v603
        %1172 = vmatpush.msra.mxu0 %v598
        %1173 = vmatpush.msra.mxu0 %v593
        %1174 = vmatpush.msra.mxu0 %v588
        %1175 = vmatpush.msra.mxu0 %v583
        %1176 = vmatpush.msra.mxu0 %v578
        %1177 = vmatpush.msra.mxu0 %v573
        %1178 = vmatpush.msra.mxu0 %v568
        %1179 = vmatpush.msra.mxu0 %v563
        %1180 = vmatpush.msra.mxu0 %v558
        %1181 = vmatmul.f32.gmra.mxu0 %v467
        %v1182 = vpop.f32.mrf.mxu0
        %v1183 = vadd.f32 %v1160, %v1182
        %1184 = vmatmul.f32.gmra.mxu0 %v471
        %v1185 = vpop.f32.mrf.mxu0
        %v1186 = vadd.f32 %v1163, %v1185
        %1187 = vdwg.mxu0
        %1188 = vmatpush.msra.mxu0 %v713
        %1189 = vmatpush.msra.mxu0 %v708
        %1190 = vmatpush.msra.mxu0 %v703
        %1191 = vmatpush.msra.mxu0 %v698
        %1192 = vmatpush.msra.mxu0 %v693
        %1193 = vmatpush.msra.mxu0 %v688
        %1194 = vmatpush.msra.mxu0 %v683
        %1195 = vmatpush.msra.mxu0 %v678
        %1196 = vmatpush.msra.mxu0 %v673
        %1197 = vmatpush.msra.mxu0 %v668
        %1198 = vmatpush.msra.mxu0 %v663
        %1199 = vmatpush.msra.mxu0 %v658
        %1200 = vmatpush.msra.mxu0 %v653
        %1201 = vmatpush.msra.mxu0 %v648
        %1202 = vmatpush.msra.mxu0 %v643
        %1203 = vmatpush.msra.mxu0 %v638
        %1204 = vmatmul.f32.gmra.mxu0 %v468
        %v1205 = vpop.f32.mrf.mxu0
        %v1206 = vadd.f32 %v1183, %v1205
        %1207 = vmatmul.f32.gmra.mxu0 %v472
        %v1208 = vpop.f32.mrf.mxu0
        %v1209 = vadd.f32 %v1186, %v1208
        %1210 = vdwg.mxu0
        %1211 = vmatpush.msra.mxu0 0.0
        %1212 = vmatpush.msra.mxu0 0.0
        %1213 = vmatpush.msra.mxu0 0.0
        %1214 = vmatpush.msra.mxu0 0.0
        %1215 = vmatpush.msra.mxu0 0.0
        %1216 = vmatpush.msra.mxu0 0.0
        %1217 = vmatpush.msra.mxu0 0.0
        %1218 = vmatpush.msra.mxu0 0.0
        %1219 = vmatpush.msra.mxu0 0.0
        %1220 = vmatpush.msra.mxu0 0.0
        %1221 = vmatpush.msra.mxu0 0.0
        %1222 = vmatpush.msra.mxu0 %v772
        %1223 = vmatpush.msra.mxu0 %v733
        %1224 = vmatpush.msra.mxu0 %v728
        %1225 = vmatpush.msra.mxu0 %v723
        %1226 = vmatpush.msra.mxu0 %v718
        %1227 = vmatmul.f32.gmra.mxu0 %v753
        %v1228 = vpop.f32.mrf.mxu0
        %v1229 = vadd.f32 %v1206, %v1228
        %1230 = vmatmul.f32.gmra.mxu0 %v756
        %v1231 = vpop.f32.mrf.mxu0
        %v1232 = vadd.f32 %v1209, %v1231
        %1233 = vdwg.mxu0
        %vm1234 = vcmp.ge.f32.partialorder %v861, 0.0
        %vm1235 = vcmp.ge.f32.partialorder %v953, 0.0
        %vm1236 = vcmp.ge.f32.partialorder %v1045, 0.0
        %vm1237 = vcmp.ge.f32.partialorder %v1137, 0.0
        %vm1238 = vcmp.ge.f32.partialorder %v1229, 0.0
        %vm1239 = vcmp.ge.f32.partialorder %v864, 0.0
        %vm1240 = vcmp.ge.f32.partialorder %v956, 0.0
        %vm1241 = vcmp.ge.f32.partialorder %v1048, 0.0
        %vm1242 = vcmp.ge.f32.partialorder %v1140, 0.0
        %vm1243 = vcmp.ge.f32.partialorder %v1232, 0.0
        %v1244 = vmul.f32 %v861, 0.01
        %v1245 = vmul.f32 %v953, 0.01
        %v1246 = vmul.f32 %v1045, 0.01
        %v1247 = vmul.f32 %v1137, 0.01
        %v1248 = vmul.f32 %v1229, 0.01
        %v1249 = vmul.f32 %v864, 0.01
        %v1250 = vmul.f32 %v956, 0.01
        %v1251 = vmul.f32 %v1048, 0.01
        %v1252 = vmul.f32 %v1140, 0.01
        %v1253 = vmul.f32 %v1232, 0.01
        %v1254 = vsel %vm1234, %v861, %v1244
        %v1255 = vsel %vm1235, %v953, %v1245
        %v1256 = vsel %vm1236, %v1045, %v1246
        %v1257 = vsel %vm1237, %v1137, %v1247
        %v1258 = vsel %vm1238, %v1229, %v1248
        %v1259 = vsel %vm1239, %v864, %v1249
        %v1260 = vsel %vm1240, %v956, %v1250
        %v1261 = vsel %vm1241, %v1048, %v1251
        %v1262 = vsel %vm1242, %v1140, %v1252
        %v1263 = vsel %vm1243, %v1232, %v1253
        %v1264 = vld [vmem:[#allocation9] sm:$0xff]
        %v1265 = vld [vmem:[#allocation9 + $0x8] sm:$0xff]
        %v1266 = vld [vmem:[#allocation9 + $0x10] sm:$0xff]
        %v1267 = vld [vmem:[#allocation9 + $0x18] sm:$0xff]
        %v1268 = vld [vmem:[#allocation9 + $0x20] sm:$0xff]
        %v1269 = vld [vmem:[#allocation9 + $0x28] sm:$0xff]
        %v1270 = vld [vmem:[#allocation9 + $0x30] sm:$0xff]
        %v1271 = vld [vmem:[#allocation9 + $0x38] sm:$0xff]
        %v1272 = vld [vmem:[#allocation9 + $0x40] sm:$0xff]
        %v1273 = vld [vmem:[#allocation9 + $0x48] sm:$0xff]
        %v1274 = vld [vmem:[#allocation9 + $0x50] sm:$0xff]
        %v1275 = vld [vmem:[#allocation9 + $0x58] sm:$0xff]
        %v1276 = vld [vmem:[#allocation9 + $0x60] sm:$0xff]
        %v1277 = vld [vmem:[#allocation9 + $0x68] sm:$0xff]
        %v1278 = vld [vmem:[#allocation9 + $0x70] sm:$0xff]
        %v1279 = vld [vmem:[#allocation9 + $0x78] sm:$0xff]
        %v1280 = vld [vmem:[#allocation9 + $0x80] sm:$0xff]
        %v1281 = vld [vmem:[#allocation9 + $0x88] sm:$0xff]
        %v1282 = vld [vmem:[#allocation9 + $0x90] sm:$0xff]
        %v1283 = vld [vmem:[#allocation9 + $0x98] sm:$0xff]
        %v1284 = vld [vmem:[#allocation9 + $0xa0] sm:$0xff]
        %v1285 = vld [vmem:[#allocation9 + $0xa8] sm:$0xff]
        %v1286 = vld [vmem:[#allocation9 + $0xb0] sm:$0xff]
        %v1287 = vld [vmem:[#allocation9 + $0xb8] sm:$0xff]
        %v1288 = vld [vmem:[#allocation9 + $0xc0] sm:$0xff]
        %v1289 = vld [vmem:[#allocation9 + $0xc8] sm:$0xff]
        %v1290 = vld [vmem:[#allocation9 + $0xd0] sm:$0xff]
        %v1291 = vld [vmem:[#allocation9 + $0xd8] sm:$0xff]
        %v1292 = vld [vmem:[#allocation9 + $0xe0] sm:$0xff]
        %v1293 = vld [vmem:[#allocation9 + $0xe8] sm:$0xff]
        %v1294 = vld [vmem:[#allocation9 + $0xf0] sm:$0xff]
        %v1295 = vld [vmem:[#allocation9 + $0xf8] sm:$0xff]
        %v1296 = vld [vmem:[#allocation9 + $0x100] sm:$0xff]
        %v1297 = vld [vmem:[#allocation9 + $0x108] sm:$0xff]
        %v1298 = vld [vmem:[#allocation9 + $0x110] sm:$0xff]
        %v1299 = vld [vmem:[#allocation9 + $0x118] sm:$0xff]
        %v1300 = vld [vmem:[#allocation9 + $0x120] sm:$0xff]
        %v1301 = vld [vmem:[#allocation9 + $0x128] sm:$0xff]
        %v1302 = vld [vmem:[#allocation9 + $0x130] sm:$0xff]
        %v1303 = vld [vmem:[#allocation9 + $0x138] sm:$0xff]
        %v1304 = vld [vmem:[#allocation9 + $0x140] sm:$0xff]
        %v1305 = vld [vmem:[#allocation9 + $0x148] sm:$0xff]
        %v1306 = vld [vmem:[#allocation9 + $0x150] sm:$0xff]
        %v1307 = vld [vmem:[#allocation9 + $0x158] sm:$0xff]
        %v1308 = vld [vmem:[#allocation9 + $0x160] sm:$0xff]
        %v1309 = vld [vmem:[#allocation9 + $0x168] sm:$0xff]
        %v1310 = vld [vmem:[#allocation9 + $0x170] sm:$0xff]
        %v1311 = vld [vmem:[#allocation9 + $0x178] sm:$0xff]
        %v1312 = vld [vmem:[#allocation9 + $0x180] sm:$0xff]
        %v1313 = vld [vmem:[#allocation9 + $0x188] sm:$0xff]
        %v1314 = vld [vmem:[#allocation9 + $0x190] sm:$0xff]
        %v1315 = vld [vmem:[#allocation9 + $0x198] sm:$0xff]
        %v1316 = vld [vmem:[#allocation9 + $0x1a0] sm:$0xff]
        %v1317 = vld [vmem:[#allocation9 + $0x1a8] sm:$0xff]
        %v1318 = vld [vmem:[#allocation9 + $0x1b0] sm:$0xff]
        %v1319 = vld [vmem:[#allocation9 + $0x1b8] sm:$0xff]
        %v1320 = vld [vmem:[#allocation9 + $0x1c0] sm:$0xff]
        %v1321 = vld [vmem:[#allocation9 + $0x1c8] sm:$0xff]
        %v1322 = vld [vmem:[#allocation9 + $0x1d0] sm:$0xff]
        %v1323 = vld [vmem:[#allocation9 + $0x1d8] sm:$0xff]
        %v1324 = vld [vmem:[#allocation9 + $0x1e0] sm:$0xff]
        %v1325 = vld [vmem:[#allocation9 + $0x1e8] sm:$0xff]
        %v1326 = vld [vmem:[#allocation9 + $0x1f0] sm:$0xff]
        %v1327 = vld [vmem:[#allocation9 + $0x1f8] sm:$0xff]
        %v1328 = vld [vmem:[#allocation9 + $0x200] sm:$0xff]
        %v1329 = vld [vmem:[#allocation9 + $0x208] sm:$0xff]
        %v1330 = vld [vmem:[#allocation9 + $0x210] sm:$0xff]
        %v1331 = vld [vmem:[#allocation9 + $0x218] sm:$0xff]
        %v1332 = vld [vmem:[#allocation9 + $0x220] sm:$0xff]
        %v1333 = vld [vmem:[#allocation9 + $0x228] sm:$0xff]
        %v1334 = vld [vmem:[#allocation9 + $0x230] sm:$0xff]
        %v1335 = vld [vmem:[#allocation9 + $0x238] sm:$0xff]
        %v1336 = vld [vmem:[#allocation9 + $0x240] sm:$0xff]
        %v1337 = vld [vmem:[#allocation9 + $0x248] sm:$0xff]
        %v1338 = vld [vmem:[#allocation9 + $0x250] sm:$0xff]
        %v1339 = vld [vmem:[#allocation9 + $0x258] sm:$0xff]
        %v1340 = vld [vmem:[#allocation9 + $0x260] sm:$0xff]
        %v1341 = vld [vmem:[#allocation9 + $0x268] sm:$0xff]
        %v1342 = vld [vmem:[#allocation9 + $0x270] sm:$0xff]
        %v1343 = vld [vmem:[#allocation9 + $0x278] sm:$0xff]
        %v1344 = vld [vmem:[#allocation9 + $0x280] sm:$0xff]
        %v1345 = vld [vmem:[#allocation9 + $0x288] sm:$0xff]
        %v1346 = vld [vmem:[#allocation9 + $0x290] sm:$0xff]
        %v1347 = vld [vmem:[#allocation9 + $0x298] sm:$0xff]
        %v1348 = vld [vmem:[#allocation9 + $0x2a0] sm:$0xff]
        %v1349 = vld [vmem:[#allocation9 + $0x2a8] sm:$0xff]
        %v1350 = vld [vmem:[#allocation9 + $0x2b0] sm:$0xff]
        %v1351 = vld [vmem:[#allocation9 + $0x2b8] sm:$0xff]
        %v1352 = vld [vmem:[#allocation9 + $0x2c0] sm:$0xff]
        %v1353 = vld [vmem:[#allocation9 + $0x2c8] sm:$0xff]
        %v1354 = vld [vmem:[#allocation9 + $0x2d0] sm:$0xff]
        %v1355 = vld [vmem:[#allocation9 + $0x2d8] sm:$0xff]
        %v1356 = vld [vmem:[#allocation9 + $0x2e0] sm:$0xff]
        %v1357 = vld [vmem:[#allocation9 + $0x2e8] sm:$0xff]
        %v1358 = vld [vmem:[#allocation9 + $0x2f0] sm:$0xff]
        %v1359 = vld [vmem:[#allocation9 + $0x2f8] sm:$0xff]
        %v1360 = vld [vmem:[#allocation9 + $0x300] sm:$0xff]
        %v1361 = vld [vmem:[#allocation9 + $0x308] sm:$0xff]
        %v1362 = vld [vmem:[#allocation9 + $0x310] sm:$0xff]
        %v1363 = vld [vmem:[#allocation9 + $0x318] sm:$0xff]
        %v1364 = vld [vmem:[#allocation9 + $0x320] sm:$0xff]
        %v1365 = vld [vmem:[#allocation9 + $0x328] sm:$0xff]
        %v1366 = vld [vmem:[#allocation9 + $0x330] sm:$0xff]
        %v1367 = vld [vmem:[#allocation9 + $0x338] sm:$0xff]
        %v1368 = vld [vmem:[#allocation9 + $0x340] sm:$0xff]
        %v1369 = vld [vmem:[#allocation9 + $0x348] sm:$0xff]
        %v1370 = vld [vmem:[#allocation9 + $0x350] sm:$0xff]
        %v1371 = vld [vmem:[#allocation9 + $0x358] sm:$0xff]
        %v1372 = vld [vmem:[#allocation9 + $0x360] sm:$0xff]
        %v1373 = vld [vmem:[#allocation9 + $0x368] sm:$0xff]
        %v1374 = vld [vmem:[#allocation9 + $0x370] sm:$0xff]
        %v1375 = vld [vmem:[#allocation9 + $0x378] sm:$0xff]
        %v1376 = vld [vmem:[#allocation9 + $0x380] sm:$0xff]
        %v1377 = vld [vmem:[#allocation9 + $0x388] sm:$0xff]
        %v1378 = vld [vmem:[#allocation9 + $0x390] sm:$0xff]
        %v1379 = vld [vmem:[#allocation9 + $0x398] sm:$0xff]
        %v1380 = vld [vmem:[#allocation9 + $0x3a0] sm:$0xff]
        %v1381 = vld [vmem:[#allocation9 + $0x3a8] sm:$0xff]
        %v1382 = vld [vmem:[#allocation9 + $0x3b0] sm:$0xff]
        %v1383 = vld [vmem:[#allocation9 + $0x3b8] sm:$0xff]
        %v1384 = vld [vmem:[#allocation9 + $0x3c0] sm:$0xff]
        %v1385 = vld [vmem:[#allocation9 + $0x3c8] sm:$0xff]
        %v1386 = vld [vmem:[#allocation9 + $0x3d0] sm:$0xff]
        %v1387 = vld [vmem:[#allocation9 + $0x3d8] sm:$0xff]
        %v1388 = vld [vmem:[#allocation9 + $0x3e0] sm:$0xff]
        %v1389 = vld [vmem:[#allocation9 + $0x3e8] sm:$0xff]
        %v1390 = vld [vmem:[#allocation9 + $0x3f0] sm:$0xff]
        %v1391 = vld [vmem:[#allocation9 + $0x3f8] sm:$0xff]
        %v1392 = vld [vmem:[#allocation9 + $0x400] sm:$0xff]
        %v1393 = vld [vmem:[#allocation9 + $0x408] sm:$0xff]
        %v1394 = vld [vmem:[#allocation9 + $0x410] sm:$0xff]
        %v1395 = vld [vmem:[#allocation9 + $0x418] sm:$0xff]
        %v1396 = vld [vmem:[#allocation9 + $0x420] sm:$0xff]
        %v1397 = vld [vmem:[#allocation9 + $0x428] sm:$0xff]
        %v1398 = vld [vmem:[#allocation9 + $0x430] sm:$0xff]
        %v1399 = vld [vmem:[#allocation9 + $0x438] sm:$0xff]
        %v1400 = vld [vmem:[#allocation9 + $0x440] sm:$0xff]
        %v1401 = vld [vmem:[#allocation9 + $0x448] sm:$0xff]
        %v1402 = vld [vmem:[#allocation9 + $0x450] sm:$0xff]
        %v1403 = vld [vmem:[#allocation9 + $0x458] sm:$0xff]
        %v1404 = vld [vmem:[#allocation9 + $0x460] sm:$0xff]
        %v1405 = vld [vmem:[#allocation9 + $0x468] sm:$0xff]
        %v1406 = vld [vmem:[#allocation9 + $0x470] sm:$0xff]
        %v1407 = vld [vmem:[#allocation9 + $0x478] sm:$0xff]
        %v1408 = vld [vmem:[#allocation9 + $0x480] sm:$0xff]
        %v1409 = vld [vmem:[#allocation9 + $0x488] sm:$0xff]
        %v1410 = vld [vmem:[#allocation9 + $0x490] sm:$0xff]
        %v1411 = vld [vmem:[#allocation9 + $0x498] sm:$0xff]
        %v1412 = vld [vmem:[#allocation9 + $0x4a0] sm:$0xff]
        %v1413 = vld [vmem:[#allocation9 + $0x4a8] sm:$0xff]
        %v1414 = vld [vmem:[#allocation9 + $0x4b0] sm:$0xff]
        %v1415 = vld [vmem:[#allocation9 + $0x4b8] sm:$0xff]
        %v1416 = vld [vmem:[#allocation9 + $0x4c0] sm:$0xff]
        %v1417 = vld [vmem:[#allocation9 + $0x4c8] sm:$0xff]
        %v1418 = vld [vmem:[#allocation9 + $0x4d0] sm:$0xff]
        %v1419 = vld [vmem:[#allocation9 + $0x4d8] sm:$0xff]
        %v1420 = vld [vmem:[#allocation9 + $0x4e0] sm:$0x3f]
        %v1421 = vld [vmem:[#allocation9 + $0x4e8] sm:$0x3f]
        %v1422 = vld [vmem:[#allocation11] sm:$0x3]
        %v1424 = vperm.slane %v1422, 0
        %v1425 = vperm.slane %v1422, 1
        %vm1428 = vcmask 965632
        %v1430 = vsel %vm1428, %v1258, 0
        %v1433 = vsel %vm1428, %v1263, 0
        %vm1435 = vcmask 1045504
        %v1437 = vsel %vm1435, %v1420, 0
        %v1440 = vsel %vm1435, %v1421, 0
        %1442 = vmatpush.msra.mxu0 %v1294
        %1443 = vmatpush.msra.mxu0 %v1292
        %1444 = vmatpush.msra.mxu0 %v1290
        %1445 = vmatpush.msra.mxu0 %v1288
        %1446 = vmatpush.msra.mxu0 %v1286
        %1447 = vmatpush.msra.mxu0 %v1284
        %1448 = vmatpush.msra.mxu0 %v1282
        %1449 = vmatpush.msra.mxu0 %v1280
        %1450 = vmatpush.msra.mxu0 %v1278
        %1451 = vmatpush.msra.mxu0 %v1276
        %1452 = vmatpush.msra.mxu0 %v1274
        %1453 = vmatpush.msra.mxu0 %v1272
        %1454 = vmatpush.msra.mxu0 %v1270
        %1455 = vmatpush.msra.mxu0 %v1268
        %1456 = vmatpush.msra.mxu0 %v1266
        %1457 = vmatpush.msra.mxu0 %v1264
        %1458 = vmatmul.f32.gmra.mxu0 %v1254
        %v1459 = vpop.f32.mrf.mxu0
        %v1460 = vadd.f32 %v1424, %v1459
        %1461 = vmatmul.f32.gmra.mxu0 %v1259
        %v1462 = vpop.f32.mrf.mxu0
        %v1463 = vadd.f32 %v1424, %v1462
        %1464 = vdwg.mxu0
        %1465 = vmatpush.msra.mxu0 %v1326
        %1466 = vmatpush.msra.mxu0 %v1324
        %1467 = vmatpush.msra.mxu0 %v1322
        %1468 = vmatpush.msra.mxu0 %v1320
        %1469 = vmatpush.msra.mxu0 %v1318
        %1470 = vmatpush.msra.mxu0 %v1316
        %1471 = vmatpush.msra.mxu0 %v1314
        %1472 = vmatpush.msra.mxu0 %v1312
        %1473 = vmatpush.msra.mxu0 %v1310
        %1474 = vmatpush.msra.mxu0 %v1308
        %1475 = vmatpush.msra.mxu0 %v1306
        %1476 = vmatpush.msra.mxu0 %v1304
        %1477 = vmatpush.msra.mxu0 %v1302
        %1478 = vmatpush.msra.mxu0 %v1300
        %1479 = vmatpush.msra.mxu0 %v1298
        %1480 = vmatpush.msra.mxu0 %v1296
        %1481 = vmatmul.f32.gmra.mxu0 %v1255
        %v1482 = vpop.f32.mrf.mxu0
        %v1483 = vadd.f32 %v1460, %v1482
        %1484 = vmatmul.f32.gmra.mxu0 %v1260
        %v1485 = vpop.f32.mrf.mxu0
        %v1486 = vadd.f32 %v1463, %v1485
        %1487 = vdwg.mxu0
        %1488 = vmatpush.msra.mxu0 %v1358
        %1489 = vmatpush.msra.mxu0 %v1356
        %1490 = vmatpush.msra.mxu0 %v1354
        %1491 = vmatpush.msra.mxu0 %v1352
        %1492 = vmatpush.msra.mxu0 %v1350
        %1493 = vmatpush.msra.mxu0 %v1348
        %1494 = vmatpush.msra.mxu0 %v1346
        %1495 = vmatpush.msra.mxu0 %v1344
        %1496 = vmatpush.msra.mxu0 %v1342
        %1497 = vmatpush.msra.mxu0 %v1340
        %1498 = vmatpush.msra.mxu0 %v1338
        %1499 = vmatpush.msra.mxu0 %v1336
        %1500 = vmatpush.msra.mxu0 %v1334
        %1501 = vmatpush.msra.mxu0 %v1332
        %1502 = vmatpush.msra.mxu0 %v1330
        %1503 = vmatpush.msra.mxu0 %v1328
        %1504 = vmatmul.f32.gmra.mxu0 %v1256
        %v1505 = vpop.f32.mrf.mxu0
        %v1506 = vadd.f32 %v1483, %v1505
        %1507 = vmatmul.f32.gmra.mxu0 %v1261
        %v1508 = vpop.f32.mrf.mxu0
        %v1509 = vadd.f32 %v1486, %v1508
        %1510 = vdwg.mxu0
        %1511 = vmatpush.msra.mxu0 %v1390
        %1512 = vmatpush.msra.mxu0 %v1388
        %1513 = vmatpush.msra.mxu0 %v1386
        %1514 = vmatpush.msra.mxu0 %v1384
        %1515 = vmatpush.msra.mxu0 %v1382
        %1516 = vmatpush.msra.mxu0 %v1380
        %1517 = vmatpush.msra.mxu0 %v1378
        %1518 = vmatpush.msra.mxu0 %v1376
        %1519 = vmatpush.msra.mxu0 %v1374
        %1520 = vmatpush.msra.mxu0 %v1372
        %1521 = vmatpush.msra.mxu0 %v1370
        %1522 = vmatpush.msra.mxu0 %v1368
        %1523 = vmatpush.msra.mxu0 %v1366
        %1524 = vmatpush.msra.mxu0 %v1364
        %1525 = vmatpush.msra.mxu0 %v1362
        %1526 = vmatpush.msra.mxu0 %v1360
        %1527 = vmatmul.f32.gmra.mxu0 %v1257
        %v1528 = vpop.f32.mrf.mxu0
        %v1529 = vadd.f32 %v1506, %v1528
        %1530 = vmatmul.f32.gmra.mxu0 %v1262
        %v1531 = vpop.f32.mrf.mxu0
        %v1532 = vadd.f32 %v1509, %v1531
        %1533 = vdwg.mxu0
        %1534 = vmatpush.msra.mxu0 0.0
        %1535 = vmatpush.msra.mxu0 %v1437
        %1536 = vmatpush.msra.mxu0 %v1418
        %1537 = vmatpush.msra.mxu0 %v1416
        %1538 = vmatpush.msra.mxu0 %v1414
        %1539 = vmatpush.msra.mxu0 %v1412
        %1540 = vmatpush.msra.mxu0 %v1410
        %1541 = vmatpush.msra.mxu0 %v1408
        %1542 = vmatpush.msra.mxu0 %v1406
        %1543 = vmatpush.msra.mxu0 %v1404
        %1544 = vmatpush.msra.mxu0 %v1402
        %1545 = vmatpush.msra.mxu0 %v1400
        %1546 = vmatpush.msra.mxu0 %v1398
        %1547 = vmatpush.msra.mxu0 %v1396
        %1548 = vmatpush.msra.mxu0 %v1394
        %1549 = vmatpush.msra.mxu0 %v1392
        %1550 = vmatmul.f32.gmra.mxu0 %v1430
        %v1551 = vpop.f32.mrf.mxu0
        %v1552 = vadd.f32 %v1529, %v1551
        %1553 = vmatmul.f32.gmra.mxu0 %v1433
        %v1554 = vpop.f32.mrf.mxu0
        %v1555 = vadd.f32 %v1532, %v1554
        %1556 = vdwg.mxu0
        %1557 = vmatpush.msra.mxu0 %v1295
        %1558 = vmatpush.msra.mxu0 %v1293
        %1559 = vmatpush.msra.mxu0 %v1291
        %1560 = vmatpush.msra.mxu0 %v1289
        %1561 = vmatpush.msra.mxu0 %v1287
        %1562 = vmatpush.msra.mxu0 %v1285
        %1563 = vmatpush.msra.mxu0 %v1283
        %1564 = vmatpush.msra.mxu0 %v1281
        %1565 = vmatpush.msra.mxu0 %v1279
        %1566 = vmatpush.msra.mxu0 %v1277
        %1567 = vmatpush.msra.mxu0 %v1275
        %1568 = vmatpush.msra.mxu0 %v1273
        %1569 = vmatpush.msra.mxu0 %v1271
        %1570 = vmatpush.msra.mxu0 %v1269
        %1571 = vmatpush.msra.mxu0 %v1267
        %1572 = vmatpush.msra.mxu0 %v1265
        %1573 = vmatmul.f32.gmra.mxu0 %v1254
        %v1574 = vpop.f32.mrf.mxu0
        %v1575 = vadd.f32 %v1425, %v1574
        %1576 = vmatmul.f32.gmra.mxu0 %v1259
        %v1577 = vpop.f32.mrf.mxu0
        %v1578 = vadd.f32 %v1425, %v1577
        %1579 = vdwg.mxu0
        %1580 = vmatpush.msra.mxu0 %v1327
        %1581 = vmatpush.msra.mxu0 %v1325
        %1582 = vmatpush.msra.mxu0 %v1323
        %1583 = vmatpush.msra.mxu0 %v1321
        %1584 = vmatpush.msra.mxu0 %v1319
        %1585 = vmatpush.msra.mxu0 %v1317
        %1586 = vmatpush.msra.mxu0 %v1315
        %1587 = vmatpush.msra.mxu0 %v1313
        %1588 = vmatpush.msra.mxu0 %v1311
        %1589 = vmatpush.msra.mxu0 %v1309
        %1590 = vmatpush.msra.mxu0 %v1307
        %1591 = vmatpush.msra.mxu0 %v1305
        %1592 = vmatpush.msra.mxu0 %v1303
        %1593 = vmatpush.msra.mxu0 %v1301
        %1594 = vmatpush.msra.mxu0 %v1299
        %1595 = vmatpush.msra.mxu0 %v1297
        %1596 = vmatmul.f32.gmra.mxu0 %v1255
        %v1597 = vpop.f32.mrf.mxu0
        %v1598 = vadd.f32 %v1575, %v1597
        %1599 = vmatmul.f32.gmra.mxu0 %v1260
        %v1600 = vpop.f32.mrf.mxu0
        %v1601 = vadd.f32 %v1578, %v1600
        %1602 = vdwg.mxu0
        %1603 = vmatpush.msra.mxu0 %v1359
        %1604 = vmatpush.msra.mxu0 %v1357
        %1605 = vmatpush.msra.mxu0 %v1355
        %1606 = vmatpush.msra.mxu0 %v1353
        %1607 = vmatpush.msra.mxu0 %v1351
        %1608 = vmatpush.msra.mxu0 %v1349
        %1609 = vmatpush.msra.mxu0 %v1347
        %1610 = vmatpush.msra.mxu0 %v1345
        %1611 = vmatpush.msra.mxu0 %v1343
        %1612 = vmatpush.msra.mxu0 %v1341
        %1613 = vmatpush.msra.mxu0 %v1339
        %1614 = vmatpush.msra.mxu0 %v1337
        %1615 = vmatpush.msra.mxu0 %v1335
        %1616 = vmatpush.msra.mxu0 %v1333
        %1617 = vmatpush.msra.mxu0 %v1331
        %1618 = vmatpush.msra.mxu0 %v1329
        %1619 = vmatmul.f32.gmra.mxu0 %v1256
        %v1620 = vpop.f32.mrf.mxu0
        %v1621 = vadd.f32 %v1598, %v1620
        %1622 = vmatmul.f32.gmra.mxu0 %v1261
        %v1623 = vpop.f32.mrf.mxu0
        %v1624 = vadd.f32 %v1601, %v1623
        %1625 = vdwg.mxu0
        %1626 = vmatpush.msra.mxu0 %v1391
        %1627 = vmatpush.msra.mxu0 %v1389
        %1628 = vmatpush.msra.mxu0 %v1387
        %1629 = vmatpush.msra.mxu0 %v1385
        %1630 = vmatpush.msra.mxu0 %v1383
        %1631 = vmatpush.msra.mxu0 %v1381
        %1632 = vmatpush.msra.mxu0 %v1379
        %1633 = vmatpush.msra.mxu0 %v1377
        %1634 = vmatpush.msra.mxu0 %v1375
        %1635 = vmatpush.msra.mxu0 %v1373
        %1636 = vmatpush.msra.mxu0 %v1371
        %1637 = vmatpush.msra.mxu0 %v1369
        %1638 = vmatpush.msra.mxu0 %v1367
        %1639 = vmatpush.msra.mxu0 %v1365
        %1640 = vmatpush.msra.mxu0 %v1363
        %1641 = vmatpush.msra.mxu0 %v1361
        %1642 = vmatmul.f32.gmra.mxu0 %v1257
        %v1643 = vpop.f32.mrf.mxu0
        %v1644 = vadd.f32 %v1621, %v1643
        %1645 = vmatmul.f32.gmra.mxu0 %v1262
        %v1646 = vpop.f32.mrf.mxu0
        %v1647 = vadd.f32 %v1624, %v1646
        %1648 = vdwg.mxu0
        %1649 = vmatpush.msra.mxu0 0.0
        %1650 = vmatpush.msra.mxu0 %v1440
        %1651 = vmatpush.msra.mxu0 %v1419
        %1652 = vmatpush.msra.mxu0 %v1417
        %1653 = vmatpush.msra.mxu0 %v1415
        %1654 = vmatpush.msra.mxu0 %v1413
        %1655 = vmatpush.msra.mxu0 %v1411
        %1656 = vmatpush.msra.mxu0 %v1409
        %1657 = vmatpush.msra.mxu0 %v1407
        %1658 = vmatpush.msra.mxu0 %v1405
        %1659 = vmatpush.msra.mxu0 %v1403
        %1660 = vmatpush.msra.mxu0 %v1401
        %1661 = vmatpush.msra.mxu0 %v1399
        %1662 = vmatpush.msra.mxu0 %v1397
        %1663 = vmatpush.msra.mxu0 %v1395
        %1664 = vmatpush.msra.mxu0 %v1393
        %1665 = vmatmul.f32.gmra.mxu0 %v1430
        %v1666 = vpop.f32.mrf.mxu0
        %v1667 = vadd.f32 %v1644, %v1666
        %1668 = vmatmul.f32.gmra.mxu0 %v1433
        %v1669 = vpop.f32.mrf.mxu0
        %v1670 = vadd.f32 %v1647, %v1669
        %1671 = vdwg.mxu0
        %1674 = vrot.lane.b32.xlu0 %v1552, 86
        %v1675 = vpop.permute.xlu0 %1674
        %1676 = vrot.lane.b32.xlu0 %v1555, 86
        %v1677 = vpop.permute.xlu0 %1676
        %v1680 = vmax.f32 %v1552, %v1675
        %v1681 = vmax.f32 %v1555, %v1677
        %1682 = vrot.lane.b32.xlu0 %v1552, 44
        %v1683 = vpop.permute.xlu0 %1682
        %1684 = vrot.lane.b32.xlu0 %v1555, 44
        %v1685 = vpop.permute.xlu0 %1684
        %v1688 = vmax.f32 %v1680, %v1683
        %v1689 = vmax.f32 %v1681, %v1685
        %1692 = vrot.lane.b32.xlu0 %v1552, 2
        %v1693 = vpop.permute.xlu0 %1692
        %1694 = vrot.lane.b32.xlu0 %v1667, 2
        %v1695 = vpop.permute.xlu0 %1694
        %1696 = vrot.lane.b32.xlu0 %v1555, 2
        %v1697 = vpop.permute.xlu0 %1696
        %1698 = vrot.lane.b32.xlu0 %v1670, 2
        %v1699 = vpop.permute.xlu0 %1698
        %vm1700 = vcmask 15360
        %v1701 = vsel %vm1700, %v1693, %v1695
        %v1702 = vsel %vm1700, %v1697, %v1699
        %v1705 = vmax.f32 %v1688, %v1701
        %v1706 = vmax.f32 %v1689, %v1702
        %1707 = vrot.lane.b32.xlu0 %v1667, 88
        %v1708 = vpop.permute.xlu0 %1707
        %1709 = vrot.lane.b32.xlu0 %v1670, 88
        %v1710 = vpop.permute.xlu0 %1709
        %v1713 = vmax.f32 %v1705, %v1708
        %v1714 = vmax.f32 %v1706, %v1710
        %1715 = vrot.lane.b32.xlu0 %v1667, 46
        %v1716 = vpop.permute.xlu0 %1715
        %1717 = vrot.lane.b32.xlu0 %v1670, 46
        %v1718 = vpop.permute.xlu0 %1717
        %v1721 = vmax.f32 %v1713, %v1716
        %v1722 = vmax.f32 %v1714, %v1718
        %vm1723 = vcmp.ge.f32.partialorder %v1721, 0.0
        %vm1724 = vcmp.ge.f32.partialorder %v1722, 0.0
        %v1725 = vmul.f32 %v1721, 0.01
        %v1726 = vmul.f32 %v1722, 0.01
        %v1727 = vsel %vm1723, %v1721, %v1725
        %v1728 = vsel %vm1724, %v1722, %v1726
        %v1729 = vld [vmem:[#allocation12] sm:$0xff]
        %v1730 = vld [vmem:[#allocation12 + $0x8] sm:$0xff]
        %v1731 = vld [vmem:[#allocation12 + $0x10] sm:$0xff]
        %v1732 = vld [vmem:[#allocation12 + $0x18] sm:$0xff]
        %v1733 = vld [vmem:[#allocation12 + $0x20] sm:$0xff]
        %v1734 = vld [vmem:[#allocation12 + $0x28] sm:$0x3]
        %v1735 = vld [vmem:[#allocation14] sm:$0x1]
        %v1737 = vperm.slane %v1735, 0
        %vm1739 = vcmask 343040
        %v1741 = vsel %vm1739, %v1727, 0
        %v1744 = vsel %vm1739, %v1728, 0
        %vm1746 = vcmask 1041408
        %v1748 = vsel %vm1746, %v1734, 0
        %1750 = vmatpush.msra.mxu0 0.0
        %1751 = vmatpush.msra.mxu0 0.0
        %1752 = vmatpush.msra.mxu0 0.0
        %1753 = vmatpush.msra.mxu0 0.0
        %1754 = vmatpush.msra.mxu0 0.0
        %1755 = vmatpush.msra.mxu0 0.0
        %1756 = vmatpush.msra.mxu0 0.0
        %1757 = vmatpush.msra.mxu0 0.0
        %1758 = vmatpush.msra.mxu0 0.0
        %1759 = vmatpush.msra.mxu0 0.0
        %1760 = vmatpush.msra.mxu0 %v1748
        %1761 = vmatpush.msra.mxu0 %v1733
        %1762 = vmatpush.msra.mxu0 %v1732
        %1763 = vmatpush.msra.mxu0 %v1731
        %1764 = vmatpush.msra.mxu0 %v1730
        %1765 = vmatpush.msra.mxu0 %v1729
        %1766 = vmatmul.f32.gmra.mxu0 %v1741
        %v1767 = vpop.f32.mrf.mxu0
        %v1768 = vadd.f32 %v1737, %v1767
        %1769 = vmatmul.f32.gmra.mxu0 %v1744
        %v1770 = vpop.f32.mrf.mxu0
        %v1771 = vadd.f32 %v1737, %v1770
        %1772 = vdwg.mxu0
        %v1773 = vmax.f32 %v1768, 0.0
        %v1774 = vmax.f32 %v1771, 0.0
        %v1775 = vld [vmem:[#allocation15] sm:$0x1]
        %v1777 = vperm.slane %v1775, 0
        %1778 = vrot.lane.b32.xlu0 %v1777, 64
        %v1779 = vpop.permute.xlu0 %1778
        %v1781 = vmul.f32 %v1773, %v1779
        %v1782 = vmul.f32 %v1774, %v1779
        %1785 = vrot.lane.b32.xlu0 %v1781, 64
        %v1786 = vpop.permute.xlu0 %1785
        %1787 = vrot.lane.b32.xlu0 %v1782, 64
        %v1788 = vpop.permute.xlu0 %1787
        %vm1791 = vcmask 261120
        %v1792 = vsel %vm1791, %v1786, 0.0
        %1793 = vadd.xlane.f32.xlu0 %v1792
        %v1794 = vpop.xlane.xlu0 %1793
        %v1795 = vsel %vm1791, %v1788, 0.0
        %1796 = vadd.xlane.f32.xlu0 %v1795
        %v1797 = vpop.xlane.xlu0 %1796
        %v1798 = vld [vmem:[#allocation2] sm:$0x1]
        %v1800 = vperm.slane %v1798, 0
        %v1802 = vadd.f32 %v1794, %v1800
        %v1803 = vadd.f32 %v1797, %v1800
        %1806 = vrot.lane.b32.xlu0 %v1768, 42
        %v1807 = vpop.permute.xlu0 %1806
        %1808 = vrot.lane.b32.xlu0 %v1771, 42
        %v1809 = vpop.permute.xlu0 %1808
        %1814 = vrot.lane.b32.xlu0 %v1802, 106
        %v1815 = vpop.permute.xlu0 %1814
        %1816 = vrot.lane.b32.xlu0 %v1803, 106
        %v1817 = vpop.permute.xlu0 %1816
        %v1820 = vsel %vm1739, %v1727, %v1807
        %v1821 = vsel %vm1739, %v1728, %v1809
        %vm1822 = vcmask 867328
        %v1823 = vsel %vm1822, %v1820, %v1815
        %v1824 = vsel %vm1822, %v1821, %v1817
        %vm1825 = vcmask 875520
        %v1826 = vsel %vm1825, %v1823, 0.0
        %v1827 = vsel %vm1825, %v1824, 0.0
        %1828 = vst [vmem:[%s463] sm:$0xff] %v1826
        %1829 = vst [vmem:[%s463 + $0x8] sm:$0xff] %v1827
        %s1830 = sand.u32 %s234, 1
        %s1831 = scalar_lea.sflag [#allocation5], %s1830
        %s1832 = sand.u32 %s234, 1
        %s1833 = smul.addr %s1832, 16
        %s1834 = scalar_lea.vmem [#allocation17], %s1833
        // Predicated region
        $region89: #{tpu_custom_call.1} parent=55 // pred_check
          %p1835 = pneg %p244
        $region90: #{tpu_custom_call.1} parent=55 // pred_check_branch
          %1837 = sbr.rel (%p1835) target = $region92
        $region91: #{tpu_custom_call.1} parent=55 // pred_region
          %s1838 = smul.u32 2, %s32
          %1840 = vsyncadd %s1831, 0
          %s1841 = smul.addr %s1838, 8
          %s1842 = scalar_lea.hbm %s9, %s1841
          %s1843 = sshll.u32 %s1834, 4
          %s1844 = int_to_ptr.vmem [resolvable:$true] %s1843
          %s1845 = sshll.u32 %s1842, 4
          %s1846 = int_to_ptr.hbm [resolvable:$true] %s1845
          %1851 = dma.vmem_to_hbm [thread:$0]  %s1844, 256, %s1846, %s1831, 128, 128, 8
        $region92: #{tpu_custom_call.1} parent=55 // pred_fallthru
          _
      $region56: #{tpu_custom_call.1} parent=5 // pred_fallthru
        _
      %p1852 = scmp.le.s32.totalorder 2, %s27
      // Predicated region
      $region93: #{tpu_custom_call.1} parent=5 // pred_check
        %p1853 = pneg %p1852
      $region94: #{tpu_custom_call.1} parent=5 // pred_check_branch
        %1855 = sbr.rel (%p1853) target = $region96
      $region95: #{tpu_custom_call.1} parent=5 // pred_region
        %s1856 = ssub.s32 %s27, 2
        // Predicated region
        $region97: #{tpu_custom_call.1} parent=95 // pred_check
          %p1857 = pneg %p250
        $region98: #{tpu_custom_call.1} parent=95 // pred_check_branch
          %1859 = sbr.rel (%p1857) target = $region100
        $region99: #{tpu_custom_call.1} parent=95 // pred_region
          %s1860 = sand.u32 %s235, 1
          %s1861 = scalar_lea.sflag [#allocation5], %s1860
          %s1862 = sand.u32 %s235, 1
          %s1863 = smul.addr %s1862, 16
          %s1864 = scalar_lea.vmem [#allocation17], %s1863
          %1866 = dma.done %s1861, 256
        $region100: #{tpu_custom_call.1} parent=95 // pred_fallthru
          _
      $region96: #{tpu_custom_call.1} parent=5 // pred_fallthru
        _
    $region6: #{tpu_custom_call.1} parent=1 // loop_footer
      %s31 = sadd.s32 1, %s27
    $region7: #{tpu_custom_call.1} parent=1 // loop_footer_branch
      %26 = sbr.rel target = $region3
    $region8: #{tpu_custom_call.1} parent=1 // loop_exit
      _
    %1867 = vsyncpa [#allocation4], 1
    %s1868 = scalar_lea.sflag [#allocation4], 1
    %1869 = vsyncpa %s1868, 1
    %1870 = vsyncpa [#allocation7], 1
    %1871 = vsyncpa [#allocation10], 1
    %1872 = vsyncpa [#allocation13], 1
    %1873 = vsyncpa [#allocation16], 1
    %1874 = vsyncpa [#allocation5], 1
    %s1875 = scalar_lea.sflag [#allocation5], 1
    %1876 = vsyncpa %s1875, 1

</llo_original>
